<compile_context>
chip_gen: v6e
topology: v6e:2x2x1
jax: 0.10.0
libtpu: 0.0.40
codegen_flags: <defaults>
</compile_context>

<pallas_src>
import functools

import jax
import jax.numpy as jnp
from jax.experimental import pallas as pl
from jax.experimental.pallas import tpu as pltpu


def _round_up(x, m):
    return ((x + m - 1) // m) * m


def _actor_kernel(num_layers, hidden_act, compute_dtype, precision, *refs):
    """refs = (obs_ref, w0, b0, w1, b1, ..., out_ref).

    obs tile : (TB, obs_dim) in the caller's dtype (cast to compute_dtype here).
    weights  : (in, out_p) in compute_dtype, resident across all grid steps.
    biases   : (1, out_p) in float32.
    out tile : (TB, action_dim_p) in compute_dtype (lane-dense store).
    """
    obs_ref = refs[0]
    out_ref = refs[-1]
    prm = refs[1:-1]

    x = obs_ref[...].astype(compute_dtype)
    for layer in range(num_layers):
        w = prm[2 * layer][...]
        b = prm[2 * layer + 1][...]
        y = jnp.dot(x, w, preferred_element_type=jnp.float32,
                    precision=precision) + b            # f32 accumulate + bias
        if layer < num_layers - 1:
            x = hidden_act(y).astype(compute_dtype)     # hidden act in f32, narrow MXU operand
        else:
            out_ref[...] = jnp.tanh(y).astype(out_ref.dtype)   # output act = tanh


def init_actor_params(key, obs_dim, action_dim, hid_sizes):
    """PyTorch-Linear-style init: U(-1/sqrt(fan_in), 1/sqrt(fan_in)).
    Weights stored as (in_dim, out_dim) so each layer is y = x @ W + b."""
    sizes = [obs_dim] + list(hid_sizes) + [action_dim]
    params = []
    for j in range(len(sizes) - 1):
        fan_in, fan_out = sizes[j], sizes[j + 1]
        key, kw, kb = jax.random.split(key, 3)
        bound = 1.0 / jnp.sqrt(jnp.float32(fan_in))
        w = jax.random.uniform(kw, (fan_in, fan_out), jnp.float32, -bound, bound)
        b = jax.random.uniform(kb, (1, fan_out), jnp.float32, -bound, bound)
        params.append((w, b))
    return params


def prepare_actor_params(params, compute_dtype=jnp.bfloat16):
    """One-time parameter prep (hoisted out of the forward call):
    zero-pad every output feature dim to a multiple of 128 lanes and cast
    weights to the MXU compute dtype (bf16 recommended; f32 for debugging).
    The obs feature dim of layer 0 is left unpadded (obs stays unpadded too).
    Returns a flat tuple (w0, b0, w1, b1, ...)."""
    compute_dtype = jnp.dtype(compute_dtype)
    prepared = []
    for layer, (w, b) in enumerate(params):
        fan_in, fan_out = w.shape
        in_p = fan_in if layer == 0 else _round_up(fan_in, 128)
        out_p = _round_up(fan_out, 128)
        w_p = jnp.zeros((in_p, out_p), compute_dtype)
        w_p = w_p.at[:fan_in, :fan_out].set(w.astype(compute_dtype))
        b_p = jnp.zeros((1, out_p), jnp.float32)
        b_p = b_p.at[:, :fan_out].set(b.astype(jnp.float32).reshape(1, -1))
        prepared += [w_p, b_p]
    return tuple(prepared)


def actor_forward(obs, prepared, *, action_dim, hidden_act=jax.nn.relu,
                  block_batch=1024):
    """MLP forward fully inside one Pallas kernel, gridded over the batch.

    prepared   : tuple from prepare_actor_params(); its weight dtype selects
                 the MXU compute dtype (bf16 fast path on all gens, f32 debug).
    block_batch: batch tile upper bound (1024 amortizes the ~0.35 us per-step
                 overhead; tile VMEM is tiny since only obs/out are tiled).
    Returns f32 actions of shape (batch, action_dim).
    """
    batch, obs_dim = obs.shape
    num_layers = len(prepared) // 2
    compute_dtype = jnp.dtype(prepared[0].dtype)
    out_dtype = compute_dtype                       # bf16 output on the fast path
    action_dim_p = prepared[-2].shape[1]
    assert prepared[0].shape[0] == obs_dim, "prepared params don't match obs_dim"

    # f32 debug path must not silently demote to bf16 MXU passes.
    precision = (jax.lax.Precision.HIGHEST
                 if compute_dtype == jnp.dtype(jnp.float32) else None)

    # --- batch tiling (multiple of 16 for bf16 sublane packing) ---
    tb = _round_up(min(block_batch, _round_up(batch, 16)), 16)
    # v7x has 2 TensorCores: guarantee >= 2 grid steps whenever the whole
    # batch would otherwise fit a single tile, so "parallel" can use both.
    if _round_up(batch, tb) == tb and tb >= 32:
        tb = _round_up(tb // 2, 8)
    batch_p = _round_up(batch, tb)
    grid = (batch_p // tb,)

    # Only a thin batch-row pad (no feature pad, no host-side dtype cast).
    obs_in = obs if batch_p == batch else jnp.pad(obs, ((0, batch_p - batch), (0, 0)))

    # --- specs: obs/out gridded over batch, params resident in VMEM ---
    # (block last dim == full obs_dim is legal even when not a multiple of 128)
    in_specs = [pl.BlockSpec((tb, obs_dim), lambda i: (i, 0))]
    for p in prepared:
        # Constant index map -> parameter stays resident across all batch tiles.
        # (For very wide nets, pipeline_mode=pl.Buffered(1) here would halve
        #  resident-param VMEM; unnecessary for TD3-sized layers.)
        in_specs.append(pl.BlockSpec(p.shape, lambda i: (0, 0)))
    out_specs = pl.BlockSpec((tb, action_dim_p), lambda i: (i, 0))

    # --- resource / cost hints ---
    param_bytes = sum(p.size * p.dtype.itemsize for p in prepared)
    widest = max(prepared[2 * l].shape[1] for l in range(num_layers))
    obs_tile_bytes = tb * obs_dim * obs_in.dtype.itemsize
    out_tile_bytes = tb * action_dim_p * jnp.dtype(out_dtype).itemsize
    vmem_need = (2 * (obs_tile_bytes + out_tile_bytes)   # double-buffered tiles
                 + 2 * param_bytes                       # default double buffer
                 + 4 * tb * widest * 4                   # f32 intermediates + slack
                 + (2 << 20))
    vmem_limit = None
    if vmem_need > (16 << 20):                 # v5e's default scoped limit
        vmem_limit = min(int(vmem_need), 60 << 20)   # stay under v7x 64 MiB physical

    flops = 2 * batch_p * sum(prepared[2 * l].shape[0] * prepared[2 * l].shape[1]
                              for l in range(num_layers))
    cost = pl.CostEstimate(
        flops=flops,
        transcendentals=batch_p * action_dim_p,
        bytes_accessed=(batch_p * obs_dim * obs_in.dtype.itemsize
                        + batch_p * action_dim_p * jnp.dtype(out_dtype).itemsize
                        + param_bytes))

    kernel = functools.partial(_actor_kernel, num_layers, hidden_act,
                               compute_dtype, precision)

    out_padded = pl.pallas_call(
        kernel,
        out_shape=jax.ShapeDtypeStruct((batch_p, action_dim_p), out_dtype),
        grid=grid,
        in_specs=in_specs,
        out_specs=out_specs,
        compiler_params=pltpu.CompilerParams(
            dimension_semantics=("parallel",),
            vmem_limit_bytes=vmem_limit),
        cost_estimate=cost,
    )(obs_in, *prepared)

    return out_padded[:batch, :action_dim].astype(jnp.float32)


def actor_forward_ref(obs, params, hidden_act=jax.nn.relu):
    x = obs.astype(jnp.float32)
    for i, (w, b) in enumerate(params):
        x = x @ w + b
        x = hidden_act(x) if i < len(params) - 1 else jnp.tanh(x)
    return x


if __name__ == "__main__":
    key = jax.random.PRNGKey(0)
    k_obs, k_obs2, k_params = jax.random.split(key, 3)

    batch, obs_dim, action_dim = 8, 16, 4
    hid_sizes = [32, 32]

    obs = jax.random.normal(k_obs, (batch, obs_dim), jnp.float32)
    params = init_actor_params(k_params, obs_dim, action_dim, hid_sizes)
    ref = actor_forward_ref(obs, params)

    # One-time parameter preparation (pad feature dims to 128, cast weights).
    prep_f32 = prepare_actor_params(params, jnp.float32)
    prep_bf16 = prepare_actor_params(params, jnp.bfloat16)

    # Jitted forward so the pad/slice/cast ops fuse around the pallas_call.
    fwd = jax.jit(functools.partial(actor_forward, action_dim=action_dim))

    # f32 debug path (precision=HIGHEST): must match the reference tightly.
    out_f32 = jax.block_until_ready(fwd(obs, prep_f32))
    assert out_f32.shape == (batch, action_dim)
    assert jnp.allclose(out_f32, ref, atol=1e-5, rtol=1e-5), "f32 mismatch vs reference"

    # bf16 MXU path (f32 accumulation, bf16 padded output): looser tolerance.
    out_bf16 = jax.block_until_ready(fwd(obs, prep_bf16))
    assert out_bf16.shape == (batch, action_dim)
    assert jnp.allclose(out_bf16, ref, atol=3e-2, rtol=3e-2), "bf16 mismatch vs reference"

    # Larger batch: exercises the >=2-step "parallel" grid (both TCs on v7x)
    # and the batch-row padding path (500 -> tile 256, grid (2,)).
    batch2 = 500
    obs2 = jax.random.normal(k_obs2, (batch2, obs_dim), jnp.float32)
    ref2 = actor_forward_ref(obs2, params)
    out2 = jax.block_until_ready(fwd(obs2, prep_bf16))
    assert out2.shape == (batch2, action_dim)
    assert jnp.allclose(out2, ref2, atol=3e-2, rtol=3e-2), "bf16 multi-tile mismatch"

    print("KERNEL_OK")
</pallas_src>

<mosaic_0001>
module attributes {stable_mosaic.version = 11 : i64} {
  func.func @_actor_kernel(%arg0: i32, %arg1: memref<16x16xf32, #tpu.memory_space<vmem>>, %arg2: memref<16x128xf32, #tpu.memory_space<vmem>>, %arg3: memref<1x128xf32, #tpu.memory_space<vmem>>, %arg4: memref<128x128xf32, #tpu.memory_space<vmem>>, %arg5: memref<1x128xf32, #tpu.memory_space<vmem>>, %arg6: memref<128x128xf32, #tpu.memory_space<vmem>>, %arg7: memref<1x128xf32, #tpu.memory_space<vmem>>, %arg8: memref<16x128xf32, #tpu.memory_space<vmem>>) attributes {dimension_semantics = [#tpu.dimension_semantics<parallel>], iteration_bounds = array<i64: 1>, scalar_prefetch = 0 : i64, scratch_operands = 0 : i64, tpu.core_type = #tpu.core_type<tc>, window_params = [{transform_indices = @transform_0, window_bounds = array<i64: 16, 16>}, {pipeline_mode = #tpu.pipeline_mode<synchronous>, transform_indices = @transform_1, window_bounds = array<i64: 16, 128>}, {pipeline_mode = #tpu.pipeline_mode<synchronous>, transform_indices = @transform_2, window_bounds = array<i64: 1, 128>}, {pipeline_mode = #tpu.pipeline_mode<synchronous>, transform_indices = @transform_3, window_bounds = array<i64: 128, 128>}, {pipeline_mode = #tpu.pipeline_mode<synchronous>, transform_indices = @transform_4, window_bounds = array<i64: 1, 128>}, {pipeline_mode = #tpu.pipeline_mode<synchronous>, transform_indices = @transform_5, window_bounds = array<i64: 128, 128>}, {pipeline_mode = #tpu.pipeline_mode<synchronous>, transform_indices = @transform_6, window_bounds = array<i64: 1, 128>}, {transform_indices = @transform_7, window_bounds = array<i64: 16, 128>}]} {
    %c0 = arith.constant 0 : index
    %c0_0 = arith.constant 0 : index
    %0 = vector.load %arg1[%c0, %c0_0] : memref<16x16xf32, #tpu.memory_space<vmem>>, vector<16x16xf32>
    %c0_1 = arith.constant 0 : index
    %c0_2 = arith.constant 0 : index
    %1 = vector.load %arg2[%c0_1, %c0_2] : memref<16x128xf32, #tpu.memory_space<vmem>>, vector<16x128xf32>
    %c0_3 = arith.constant 0 : index
    %c0_4 = arith.constant 0 : index
    %2 = vector.load %arg3[%c0_3, %c0_4] : memref<1x128xf32, #tpu.memory_space<vmem>>, vector<1x128xf32>
    %cst = arith.constant dense<0.000000e+00> : vector<16x128xf32>
    %3 = tpu.matmul %0, %1, %cst {dimension_numbers = #tpu.dot_dimension_numbers<[1], [0], [0], [1], [0, 0, 1, 1], [], []>, precision = #tpu.contract_precision<fp32>} : vector<16x16xf32>, vector<16x128xf32>, vector<16x128xf32> -> vector<16x128xf32>
    %4 = vector.broadcast %2 : vector<1x128xf32> to vector<16x128xf32>
    %5 = arith.addf %3, %4 : vector<16x128xf32>
    %cst_5 = arith.constant 0.000000e+00 : f32
    %6 = vector.broadcast %cst_5 : f32 to vector<16x128xf32>
    %7 = arith.maximumf %5, %6 : vector<16x128xf32>
    %c0_6 = arith.constant 0 : index
    %c0_7 = arith.constant 0 : index
    %8 = vector.load %arg4[%c0_6, %c0_7] : memref<128x128xf32, #tpu.memory_space<vmem>>, vector<128x128xf32>
    %c0_8 = arith.constant 0 : index
    %c0_9 = arith.constant 0 : index
    %9 = vector.load %arg5[%c0_8, %c0_9] : memref<1x128xf32, #tpu.memory_space<vmem>>, vector<1x128xf32>
    %cst_10 = arith.constant dense<0.000000e+00> : vector<16x128xf32>
    %10 = tpu.matmul %7, %8, %cst_10 {dimension_numbers = #tpu.dot_dimension_numbers<[1], [0], [0], [1], [0, 0, 1, 1], [], []>, precision = #tpu.contract_precision<fp32>} : vector<16x128xf32>, vector<128x128xf32>, vector<16x128xf32> -> vector<16x128xf32>
    %11 = vector.broadcast %9 : vector<1x128xf32> to vector<16x128xf32>
    %12 = arith.addf %10, %11 : vector<16x128xf32>
    %cst_11 = arith.constant 0.000000e+00 : f32
    %13 = vector.broadcast %cst_11 : f32 to vector<16x128xf32>
    %14 = arith.maximumf %12, %13 : vector<16x128xf32>
    %c0_12 = arith.constant 0 : index
    %c0_13 = arith.constant 0 : index
    %15 = vector.load %arg6[%c0_12, %c0_13] : memref<128x128xf32, #tpu.memory_space<vmem>>, vector<128x128xf32>
    %c0_14 = arith.constant 0 : index
    %c0_15 = arith.constant 0 : index
    %16 = vector.load %arg7[%c0_14, %c0_15] : memref<1x128xf32, #tpu.memory_space<vmem>>, vector<1x128xf32>
    %cst_16 = arith.constant dense<0.000000e+00> : vector<16x128xf32>
    %17 = tpu.matmul %14, %15, %cst_16 {dimension_numbers = #tpu.dot_dimension_numbers<[1], [0], [0], [1], [0, 0, 1, 1], [], []>, precision = #tpu.contract_precision<fp32>} : vector<16x128xf32>, vector<128x128xf32>, vector<16x128xf32> -> vector<16x128xf32>
    %18 = vector.broadcast %16 : vector<1x128xf32> to vector<16x128xf32>
    %19 = arith.addf %17, %18 : vector<16x128xf32>
    %20 = math.tanh %19 : vector<16x128xf32>
    %c0_17 = arith.constant 0 : index
    %c0_18 = arith.constant 0 : index
    %21 = vector.load %arg8[%c0_17, %c0_18] : memref<16x128xf32, #tpu.memory_space<vmem>>, vector<16x128xf32>
    tpu.vector_store %arg8[%c0_17, %c0_18], %20 {strides = array<i32>} : memref<16x128xf32, #tpu.memory_space<vmem>>, vector<16x128xf32>,
    return
  }
  func.func @transform_0(%arg0: i32) -> (i32, i32) {
    %c0_i32 = arith.constant 0 : i32
    %c0_i32_0 = arith.constant 0 : i32
    return %arg0, %c0_i32 : i32, i32
  }
  func.func @transform_1(%arg0: i32) -> (i32, i32) {
    %c0_i32 = arith.constant 0 : i32
    %c0_i32_0 = arith.constant 0 : i32
    %c0_i32_1 = arith.constant 0 : i32
    return %c0_i32, %c0_i32_0 : i32, i32
  }
  func.func @transform_2(%arg0: i32) -> (i32, i32) {
    %c0_i32 = arith.constant 0 : i32
    %c0_i32_0 = arith.constant 0 : i32
    %c0_i32_1 = arith.constant 0 : i32
    return %c0_i32, %c0_i32_0 : i32, i32
  }
  func.func @transform_3(%arg0: i32) -> (i32, i32) {
    %c0_i32 = arith.constant 0 : i32
    %c0_i32_0 = arith.constant 0 : i32
    %c0_i32_1 = arith.constant 0 : i32
    return %c0_i32, %c0_i32_0 : i32, i32
  }
  func.func @transform_4(%arg0: i32) -> (i32, i32) {
    %c0_i32 = arith.constant 0 : i32
    %c0_i32_0 = arith.constant 0 : i32
    %c0_i32_1 = arith.constant 0 : i32
    return %c0_i32, %c0_i32_0 : i32, i32
  }
  func.func @transform_5(%arg0: i32) -> (i32, i32) {
    %c0_i32 = arith.constant 0 : i32
    %c0_i32_0 = arith.constant 0 : i32
    %c0_i32_1 = arith.constant 0 : i32
    return %c0_i32, %c0_i32_0 : i32, i32
  }
  func.func @transform_6(%arg0: i32) -> (i32, i32) {
    %c0_i32 = arith.constant 0 : i32
    %c0_i32_0 = arith.constant 0 : i32
    %c0_i32_1 = arith.constant 0 : i32
    return %c0_i32, %c0_i32_0 : i32, i32
  }
  func.func @transform_7(%arg0: i32) -> (i32, i32) {
    %c0_i32 = arith.constant 0 : i32
    %c0_i32_0 = arith.constant 0 : i32
    return %arg0, %c0_i32 : i32, i32
  }
}

</mosaic_0001>

<llo_original>
// kernel: actor_forward.1
$region0: #{actor_forward.1}
  #allocation0 [shape = 'u32[]', space=smem, size = 0x4, offset = 0x4, fixed_abs, tag = 'smem constant byte address 0x4 - core index']
  #allocation1 [shape = 'u32[144,128]{1,0:T(1,128)}', space=vmem, size = 0x12000, scoped, tag = 'internal scratch']
  %s0 = inlined_call_operand.vmem [shape: f32[16,16], index: 0, kind: input, shape index: {}]
  %s1 = inlined_call_operand.vmem [shape: f32[16,128], index: 1, kind: input, shape index: {}]
  %s2 = inlined_call_operand.vmem [shape: f32[1,128], index: 2, kind: input, shape index: {}]
  %s3 = inlined_call_operand.hbm [shape: f32[128,128], index: 3, kind: input, shape index: {}]
  %s4 = inlined_call_operand.vmem [shape: f32[1,128], index: 4, kind: input, shape index: {}]
  %s5 = inlined_call_operand.hbm [shape: f32[128,128], index: 5, kind: input, shape index: {}]
  %s6 = inlined_call_operand.vmem [shape: f32[1,128], index: 6, kind: input, shape index: {}]
  %s7 = inlined_call_operand.vmem [shape: f32[16,128], index: 7, kind: output, shape index: {}]
  %s8 = sld [smem:[#allocation0]]
  $region46: #{actor_forward.1} parent=0
    _
  %s10 = ssub.s32 1, %s8
  %s11 = scalar_select 0, %s10, %s8
  $region1: #{actor_forward.1} parent=0
    #allocation2 [shape = 'u8[65536]{0}', space=vmem, size = 0x10000, scoped, tag = 'input window, operand 3, single buffered']
    #allocation3 [shape = 's32[1]{0}', space=sflag, size = 0x4, scoped, tag = 'scoped memory for actor_forward.1']
    #allocation4 [shape = 'u8[65536]{0}', space=vmem, size = 0x10000, scoped, tag = 'input window, operand 5, single buffered']
    #allocation5 [shape = 's32[1]{0}', space=sflag, size = 0x4, scoped, tag = 'scoped memory for actor_forward.1']
    %12 = vsyncpa [#allocation3], 0
    %13 = vsyncpa [#allocation5], 0
    // Predicated region
    $region2: #{actor_forward.1} parent=1 // pred_check
      _
    $region3: #{actor_forward.1} parent=1 // pred_check_branch
      %15 = sbr.rel (0) target = $region5
    $region4: #{actor_forward.1} parent=1 // pred_region
      _
    $region5: #{actor_forward.1} parent=1 // pred_fallthru
      _
    // Predicated region
    $region6: #{actor_forward.1} parent=1 // pred_check
      _
    $region7: #{actor_forward.1} parent=1 // pred_check_branch
      %17 = sbr.rel (0) target = $region9
    $region8: #{actor_forward.1} parent=1 // pred_region
      _
    $region9: #{actor_forward.1} parent=1 // pred_fallthru
      _
    // Predicated region
    $region10: #{actor_forward.1} parent=1 // pred_check
      _
    $region11: #{actor_forward.1} parent=1 // pred_check_branch
      %19 = sbr.rel (0) target = $region13
    $region12: #{actor_forward.1} parent=1 // pred_region
      _
    $region13: #{actor_forward.1} parent=1 // pred_fallthru
      _
    // Predicated region
    $region14: #{actor_forward.1} parent=1 // pred_check
      _
    $region15: #{actor_forward.1} parent=1 // pred_check_branch
      %21 = sbr.rel (0) target = $region17
    $region16: #{actor_forward.1} parent=1 // pred_region
      %s23 = ssub.s32 2048, 2048
      %24 = vsyncadd [#allocation3], %s23
      %s25 = sshll.u32 [#allocation2], 4
      %s26 = int_to_ptr.vmem [resolvable:$true] %s25
      %31 = dma.hbm_to_vmem [thread:$0]  %s3, 2048, %s26, [#allocation3], 128, 128, 8
    $region17: #{actor_forward.1} parent=1 // pred_fallthru
      _
    // Predicated region
    $region18: #{actor_forward.1} parent=1 // pred_check
      _
    $region19: #{actor_forward.1} parent=1 // pred_check_branch
      %33 = sbr.rel (0) target = $region21
    $region20: #{actor_forward.1} parent=1 // pred_region
      _
    $region21: #{actor_forward.1} parent=1 // pred_fallthru
      _
    // Predicated region
    $region22: #{actor_forward.1} parent=1 // pred_check
      _
    $region23: #{actor_forward.1} parent=1 // pred_check_branch
      %35 = sbr.rel (0) target = $region25
    $region24: #{actor_forward.1} parent=1 // pred_region
      %s37 = ssub.s32 2048, 2048
      %38 = vsyncadd [#allocation5], %s37
      %s39 = sshll.u32 [#allocation4], 4
      %s40 = int_to_ptr.vmem [resolvable:$true] %s39
      %45 = dma.hbm_to_vmem [thread:$0]  %s5, 2048, %s40, [#allocation5], 128, 128, 8
    $region25: #{actor_forward.1} parent=1 // pred_fallthru
      _
    // Predicated region
    $region26: #{actor_forward.1} parent=1 // pred_check
      _
    $region27: #{actor_forward.1} parent=1 // pred_check_branch
      %47 = sbr.rel (0) target = $region29
    $region28: #{actor_forward.1} parent=1 // pred_region
      _
    $region29: #{actor_forward.1} parent=1 // pred_fallthru
      _
    // Predicated region
    $region30: #{actor_forward.1} parent=1 // pred_check
      _
    $region31: #{actor_forward.1} parent=1 // pred_check_branch
      %49 = sbr.rel (0) target = $region33
    $region32: #{actor_forward.1} parent=1 // pred_region
      %50 = dma.done [#allocation3], 2048
    $region33: #{actor_forward.1} parent=1 // pred_fallthru
      _
    // Predicated region
    $region34: #{actor_forward.1} parent=1 // pred_check
      _
    $region35: #{actor_forward.1} parent=1 // pred_check_branch
      %52 = sbr.rel (0) target = $region37
    $region36: #{actor_forward.1} parent=1 // pred_region
      %53 = dma.done [#allocation5], 2048
    $region37: #{actor_forward.1} parent=1 // pred_fallthru
      _
    %v54 = vld [vmem:[%s0] sm:$0xff]
    %v55 = vld [vmem:[%s0 + $0x8] sm:$0xff]
    %v56 = vld [vmem:[%s1] sm:$0xff]
    %v57 = vld [vmem:[%s1 + $0x8] sm:$0xff]
    %v58 = vld [vmem:[%s2] sm:$0x1]
    %v60 = vlaneseq
    %v61 = vshrl.u32 %v60, 7
    %v62 = vsub.s32 0, %v61
    %v63 = vrot.slane %v58, %v62
    %vm65 = vcmask 130048
    %v67 = vsel %vm65, %v54, 0
    %v70 = vsel %vm65, %v55, 0
    %72 = vmatprep.subr.mxu0 0.0
    %73 = vmatpush1.msra.mxu0 0.0
    %74 = vmatprep.subr.mxu0 0.0
    %75 = vmatpush1.msra.mxu0 0.0
    %76 = vmatprep.subr.mxu0 0.0
    %77 = vmatpush1.msra.mxu0 0.0
    %78 = vmatprep.subr.mxu0 0.0
    %79 = vmatpush1.msra.mxu0 0.0
    %80 = vmatprep.subr.mxu0 0.0
    %81 = vmatpush1.msra.mxu0 0.0
    %82 = vmatprep.subr.mxu0 0.0
    %83 = vmatpush1.msra.mxu0 0.0
    %84 = vmatprep.subr.mxu0 0.0
    %85 = vmatpush1.msra.mxu0 0.0
    %86 = vmatprep.subr.mxu0 0.0
    %87 = vmatpush1.msra.mxu0 0.0
    %88 = vmatprep.subr.mxu0 0.0
    %89 = vmatpush1.msra.mxu0 0.0
    %90 = vmatprep.subr.mxu0 0.0
    %91 = vmatpush1.msra.mxu0 0.0
    %92 = vmatprep.subr.mxu0 0.0
    %93 = vmatpush1.msra.mxu0 0.0
    %94 = vmatprep.subr.mxu0 0.0
    %95 = vmatpush1.msra.mxu0 0.0
    %96 = vmatprep.subr.mxu0 0.0
    %97 = vmatpush1.msra.mxu0 0.0
    %98 = vmatprep.subr.mxu0 0.0
    %99 = vmatpush1.msra.mxu0 0.0
    %100 = vmatprep.subr.mxu0 0.0
    %v101 = vand.u32 %v57, 4294901760
    %102 = vmatpush1.msra.mxu0 %v101
    %103 = vmatprep.subr.mxu0 0.0
    %v104 = vand.u32 %v56, 4294901760
    %105 = vmatpush1.msra.mxu0 %v104
    %106 = vmatprep.subr.mxu0 0.0
    %107 = vmatpush2.msra.mxu0 0.0
    %108 = vmatprep.subr.mxu0 0.0
    %109 = vmatpush2.msra.mxu0 0.0
    %110 = vmatprep.subr.mxu0 0.0
    %111 = vmatpush2.msra.mxu0 0.0
    %112 = vmatprep.subr.mxu0 0.0
    %113 = vmatpush2.msra.mxu0 0.0
    %114 = vmatprep.subr.mxu0 0.0
    %115 = vmatpush2.msra.mxu0 0.0
    %116 = vmatprep.subr.mxu0 0.0
    %117 = vmatpush2.msra.mxu0 0.0
    %118 = vmatprep.subr.mxu0 0.0
    %119 = vmatpush2.msra.mxu0 0.0
    %120 = vmatprep.subr.mxu0 0.0
    %121 = vmatpush2.msra.mxu0 0.0
    %122 = vmatprep.subr.mxu0 0.0
    %123 = vmatpush2.msra.mxu0 0.0
    %124 = vmatprep.subr.mxu0 0.0
    %125 = vmatpush2.msra.mxu0 0.0
    %126 = vmatprep.subr.mxu0 0.0
    %127 = vmatpush2.msra.mxu0 0.0
    %128 = vmatprep.subr.mxu0 0.0
    %129 = vmatpush2.msra.mxu0 0.0
    %130 = vmatprep.subr.mxu0 0.0
    %131 = vmatpush2.msra.mxu0 0.0
    %132 = vmatprep.subr.mxu0 0.0
    %133 = vmatpush2.msra.mxu0 0.0
    %134 = vmatprep.subr.mxu0 0.0
    %135 = vmatpush2.msra.mxu0 0.0
    %136 = vmatprep.subr.mxu0 0.0
    %137 = vmatpush2.msra.mxu0 0.0
    %138 = vmatprep.mubr.f32.mxu0 0.0
    %v139 = vand.u32 %v67, 4294901760
    %v140 = vsub.f32 %v67, %v139
    %v141 = vand.u32 %v140, 4294901760
    %v142 = vsub.f32 %v140, %v141
    %v143 = vand.u32 %v142, 4294901760
    %144 = vmatmul.mubr.f32.gmra.mxu0 %v143
    %v145 = vpop.f32.mrf.mxu0
    %v146 = vadd.f32 %v63, %v145
    %v147 = vpop.f32.mrf.mxu0
    %148 = vmatprep.mubr.f32.mxu0 0.0
    %v149 = vand.u32 %v70, 4294901760
    %v150 = vsub.f32 %v70, %v149
    %v151 = vand.u32 %v150, 4294901760
    %v152 = vsub.f32 %v150, %v151
    %v153 = vand.u32 %v152, 4294901760
    %154 = vmatmul.mubr.f32.gmra.mxu0 %v153
    %v155 = vpop.f32.mrf.mxu0
    %v156 = vadd.f32 %v63, %v155
    %v157 = vpop.f32.mrf.mxu0
    %158 = vdwg.mxu0
    %159 = vmatprep.subr.mxu0 0.0
    %160 = vmatpush1.msra.mxu0 0.0
    %161 = vmatprep.subr.mxu0 0.0
    %162 = vmatpush1.msra.mxu0 0.0
    %163 = vmatprep.subr.mxu0 0.0
    %164 = vmatpush1.msra.mxu0 0.0
    %165 = vmatprep.subr.mxu0 0.0
    %166 = vmatpush1.msra.mxu0 0.0
    %167 = vmatprep.subr.mxu0 0.0
    %168 = vmatpush1.msra.mxu0 0.0
    %169 = vmatprep.subr.mxu0 0.0
    %170 = vmatpush1.msra.mxu0 0.0
    %171 = vmatprep.subr.mxu0 0.0
    %172 = vmatpush1.msra.mxu0 0.0
    %173 = vmatprep.subr.mxu0 0.0
    %174 = vmatpush1.msra.mxu0 0.0
    %175 = vmatprep.subr.mxu0 0.0
    %176 = vmatpush1.msra.mxu0 0.0
    %177 = vmatprep.subr.mxu0 0.0
    %178 = vmatpush1.msra.mxu0 0.0
    %179 = vmatprep.subr.mxu0 0.0
    %180 = vmatpush1.msra.mxu0 0.0
    %181 = vmatprep.subr.mxu0 0.0
    %182 = vmatpush1.msra.mxu0 0.0
    %183 = vmatprep.subr.mxu0 0.0
    %184 = vmatpush1.msra.mxu0 0.0
    %185 = vmatprep.subr.mxu0 0.0
    %186 = vmatpush1.msra.mxu0 0.0
    %187 = vmatprep.subr.mxu0 0.0
    %v188 = vand.u32 %v57, 4294901760
    %v189 = vsub.f32 %v57, %v188
    %v190 = vand.u32 %v189, 4294901760
    %v191 = vsub.f32 %v189, %v190
    %v192 = vand.u32 %v191, 4294901760
    %193 = vmatpush1.msra.mxu0 %v192
    %194 = vmatprep.subr.mxu0 0.0
    %v195 = vand.u32 %v56, 4294901760
    %v196 = vsub.f32 %v56, %v195
    %v197 = vand.u32 %v196, 4294901760
    %v198 = vsub.f32 %v196, %v197
    %v199 = vand.u32 %v198, 4294901760
    %200 = vmatpush1.msra.mxu0 %v199
    %201 = vmatprep.subr.mxu0 0.0
    %202 = vmatpush2.msra.mxu0 0.0
    %203 = vmatprep.subr.mxu0 0.0
    %204 = vmatpush2.msra.mxu0 0.0
    %205 = vmatprep.subr.mxu0 0.0
    %206 = vmatpush2.msra.mxu0 0.0
    %207 = vmatprep.subr.mxu0 0.0
    %208 = vmatpush2.msra.mxu0 0.0
    %209 = vmatprep.subr.mxu0 0.0
    %210 = vmatpush2.msra.mxu0 0.0
    %211 = vmatprep.subr.mxu0 0.0
    %212 = vmatpush2.msra.mxu0 0.0
    %213 = vmatprep.subr.mxu0 0.0
    %214 = vmatpush2.msra.mxu0 0.0
    %215 = vmatprep.subr.mxu0 0.0
    %216 = vmatpush2.msra.mxu0 0.0
    %217 = vmatprep.subr.mxu0 0.0
    %218 = vmatpush2.msra.mxu0 0.0
    %219 = vmatprep.subr.mxu0 0.0
    %220 = vmatpush2.msra.mxu0 0.0
    %221 = vmatprep.subr.mxu0 0.0
    %222 = vmatpush2.msra.mxu0 0.0
    %223 = vmatprep.subr.mxu0 0.0
    %224 = vmatpush2.msra.mxu0 0.0
    %225 = vmatprep.subr.mxu0 0.0
    %226 = vmatpush2.msra.mxu0 0.0
    %227 = vmatprep.subr.mxu0 0.0
    %228 = vmatpush2.msra.mxu0 0.0
    %229 = vmatprep.subr.mxu0 0.0
    %230 = vmatpush2.msra.mxu0 0.0
    %231 = vmatprep.subr.mxu0 0.0
    %232 = vmatpush2.msra.mxu0 0.0
    %233 = vmatprep.mubr.f32.mxu0 0.0
    %v234 = vand.u32 %v67, 4294901760
    %235 = vmatmul.mubr.f32.gmra.mxu0 %v234
    %v236 = vpop.f32.mrf.mxu0
    %v237 = vadd.f32 %v146, %v236
    %v238 = vpop.f32.mrf.mxu0
    %239 = vmatprep.mubr.f32.mxu0 0.0
    %v240 = vand.u32 %v70, 4294901760
    %241 = vmatmul.mubr.f32.gmra.mxu0 %v240
    %v242 = vpop.f32.mrf.mxu0
    %v243 = vadd.f32 %v156, %v242
    %v244 = vpop.f32.mrf.mxu0
    %245 = vdwg.mxu0
    %246 = vmatprep.subr.mxu0 0.0
    %247 = vmatpush1.msra.mxu0 0.0
    %248 = vmatprep.subr.mxu0 0.0
    %249 = vmatpush1.msra.mxu0 0.0
    %250 = vmatprep.subr.mxu0 0.0
    %251 = vmatpush1.msra.mxu0 0.0
    %252 = vmatprep.subr.mxu0 0.0
    %253 = vmatpush1.msra.mxu0 0.0
    %254 = vmatprep.subr.mxu0 0.0
    %255 = vmatpush1.msra.mxu0 0.0
    %256 = vmatprep.subr.mxu0 0.0
    %257 = vmatpush1.msra.mxu0 0.0
    %258 = vmatprep.subr.mxu0 0.0
    %259 = vmatpush1.msra.mxu0 0.0
    %260 = vmatprep.subr.mxu0 0.0
    %261 = vmatpush1.msra.mxu0 0.0
    %262 = vmatprep.subr.mxu0 0.0
    %263 = vmatpush1.msra.mxu0 0.0
    %264 = vmatprep.subr.mxu0 0.0
    %265 = vmatpush1.msra.mxu0 0.0
    %266 = vmatprep.subr.mxu0 0.0
    %267 = vmatpush1.msra.mxu0 0.0
    %268 = vmatprep.subr.mxu0 0.0
    %269 = vmatpush1.msra.mxu0 0.0
    %270 = vmatprep.subr.mxu0 0.0
    %271 = vmatpush1.msra.mxu0 0.0
    %272 = vmatprep.subr.mxu0 0.0
    %273 = vmatpush1.msra.mxu0 0.0
    %274 = vmatprep.subr.mxu0 0.0
    %v275 = vand.u32 %v57, 4294901760
    %v276 = vsub.f32 %v57, %v275
    %277 = vmatpush1.msra.mxu0 %v276
    %278 = vmatprep.subr.mxu0 0.0
    %v279 = vand.u32 %v56, 4294901760
    %v280 = vsub.f32 %v56, %v279
    %281 = vmatpush1.msra.mxu0 %v280
    %282 = vmatprep.subr.mxu0 0.0
    %283 = vmatpush2.msra.mxu0 0.0
    %284 = vmatprep.subr.mxu0 0.0
    %285 = vmatpush2.msra.mxu0 0.0
    %286 = vmatprep.subr.mxu0 0.0
    %287 = vmatpush2.msra.mxu0 0.0
    %288 = vmatprep.subr.mxu0 0.0
    %289 = vmatpush2.msra.mxu0 0.0
    %290 = vmatprep.subr.mxu0 0.0
    %291 = vmatpush2.msra.mxu0 0.0
    %292 = vmatprep.subr.mxu0 0.0
    %293 = vmatpush2.msra.mxu0 0.0
    %294 = vmatprep.subr.mxu0 0.0
    %295 = vmatpush2.msra.mxu0 0.0
    %296 = vmatprep.subr.mxu0 0.0
    %297 = vmatpush2.msra.mxu0 0.0
    %298 = vmatprep.subr.mxu0 0.0
    %299 = vmatpush2.msra.mxu0 0.0
    %300 = vmatprep.subr.mxu0 0.0
    %301 = vmatpush2.msra.mxu0 0.0
    %302 = vmatprep.subr.mxu0 0.0
    %303 = vmatpush2.msra.mxu0 0.0
    %304 = vmatprep.subr.mxu0 0.0
    %305 = vmatpush2.msra.mxu0 0.0
    %306 = vmatprep.subr.mxu0 0.0
    %307 = vmatpush2.msra.mxu0 0.0
    %308 = vmatprep.subr.mxu0 0.0
    %309 = vmatpush2.msra.mxu0 0.0
    %310 = vmatprep.subr.mxu0 0.0
    %311 = vmatpush2.msra.mxu0 0.0
    %312 = vmatprep.subr.mxu0 0.0
    %313 = vmatpush2.msra.mxu0 0.0
    %314 = vmatprep.mubr.f32.mxu0 0.0
    %v315 = vand.u32 %v67, 4294901760
    %v316 = vsub.f32 %v67, %v315
    %317 = vmatmul.mubr.f32.gmra.mxu0 %v316
    %v318 = vpop.f32.mrf.mxu0
    %v319 = vadd.f32 %v237, %v318
    %v320 = vpop.f32.mrf.mxu0
    %321 = vmatprep.mubr.f32.mxu0 0.0
    %v322 = vand.u32 %v70, 4294901760
    %v323 = vsub.f32 %v70, %v322
    %324 = vmatmul.mubr.f32.gmra.mxu0 %v323
    %v325 = vpop.f32.mrf.mxu0
    %v326 = vadd.f32 %v243, %v325
    %v327 = vpop.f32.mrf.mxu0
    %328 = vdwg.mxu0
    %329 = vmatprep.subr.mxu0 0.0
    %330 = vmatpush1.msra.mxu0 0.0
    %331 = vmatprep.subr.mxu0 0.0
    %332 = vmatpush1.msra.mxu0 0.0
    %333 = vmatprep.subr.mxu0 0.0
    %334 = vmatpush1.msra.mxu0 0.0
    %335 = vmatprep.subr.mxu0 0.0
    %336 = vmatpush1.msra.mxu0 0.0
    %337 = vmatprep.subr.mxu0 0.0
    %338 = vmatpush1.msra.mxu0 0.0
    %339 = vmatprep.subr.mxu0 0.0
    %340 = vmatpush1.msra.mxu0 0.0
    %341 = vmatprep.subr.mxu0 0.0
    %342 = vmatpush1.msra.mxu0 0.0
    %343 = vmatprep.subr.mxu0 0.0
    %344 = vmatpush1.msra.mxu0 0.0
    %345 = vmatprep.subr.mxu0 0.0
    %346 = vmatpush1.msra.mxu0 0.0
    %347 = vmatprep.subr.mxu0 0.0
    %348 = vmatpush1.msra.mxu0 0.0
    %349 = vmatprep.subr.mxu0 0.0
    %350 = vmatpush1.msra.mxu0 0.0
    %351 = vmatprep.subr.mxu0 0.0
    %352 = vmatpush1.msra.mxu0 0.0
    %353 = vmatprep.subr.mxu0 0.0
    %354 = vmatpush1.msra.mxu0 0.0
    %355 = vmatprep.subr.mxu0 0.0
    %356 = vmatpush1.msra.mxu0 0.0
    %357 = vmatprep.subr.mxu0 0.0
    %v358 = vand.u32 %v57, 4294901760
    %359 = vmatpush1.msra.mxu0 %v358
    %360 = vmatprep.subr.mxu0 0.0
    %v361 = vand.u32 %v56, 4294901760
    %362 = vmatpush1.msra.mxu0 %v361
    %363 = vmatprep.subr.mxu0 0.0
    %364 = vmatpush2.msra.mxu0 0.0
    %365 = vmatprep.subr.mxu0 0.0
    %366 = vmatpush2.msra.mxu0 0.0
    %367 = vmatprep.subr.mxu0 0.0
    %368 = vmatpush2.msra.mxu0 0.0
    %369 = vmatprep.subr.mxu0 0.0
    %370 = vmatpush2.msra.mxu0 0.0
    %371 = vmatprep.subr.mxu0 0.0
    %372 = vmatpush2.msra.mxu0 0.0
    %373 = vmatprep.subr.mxu0 0.0
    %374 = vmatpush2.msra.mxu0 0.0
    %375 = vmatprep.subr.mxu0 0.0
    %376 = vmatpush2.msra.mxu0 0.0
    %377 = vmatprep.subr.mxu0 0.0
    %378 = vmatpush2.msra.mxu0 0.0
    %379 = vmatprep.subr.mxu0 0.0
    %380 = vmatpush2.msra.mxu0 0.0
    %381 = vmatprep.subr.mxu0 0.0
    %382 = vmatpush2.msra.mxu0 0.0
    %383 = vmatprep.subr.mxu0 0.0
    %384 = vmatpush2.msra.mxu0 0.0
    %385 = vmatprep.subr.mxu0 0.0
    %386 = vmatpush2.msra.mxu0 0.0
    %387 = vmatprep.subr.mxu0 0.0
    %388 = vmatpush2.msra.mxu0 0.0
    %389 = vmatprep.subr.mxu0 0.0
    %390 = vmatpush2.msra.mxu0 0.0
    %391 = vmatprep.subr.mxu0 0.0
    %392 = vmatpush2.msra.mxu0 0.0
    %393 = vmatprep.subr.mxu0 0.0
    %394 = vmatpush2.msra.mxu0 0.0
    %395 = vmatprep.mubr.f32.mxu0 0.0
    %v396 = vand.u32 %v67, 4294901760
    %v397 = vsub.f32 %v67, %v396
    %v398 = vand.u32 %v397, 4294901760
    %399 = vmatmul.mubr.f32.gmra.mxu0 %v398
    %v400 = vpop.f32.mrf.mxu0
    %v401 = vadd.f32 %v319, %v400
    %v402 = vpop.f32.mrf.mxu0
    %403 = vmatprep.mubr.f32.mxu0 0.0
    %v404 = vand.u32 %v70, 4294901760
    %v405 = vsub.f32 %v70, %v404
    %v406 = vand.u32 %v405, 4294901760
    %407 = vmatmul.mubr.f32.gmra.mxu0 %v406
    %v408 = vpop.f32.mrf.mxu0
    %v409 = vadd.f32 %v326, %v408
    %v410 = vpop.f32.mrf.mxu0
    %411 = vdwg.mxu0
    %412 = vmatprep.subr.mxu0 0.0
    %413 = vmatpush1.msra.mxu0 0.0
    %414 = vmatprep.subr.mxu0 0.0
    %415 = vmatpush1.msra.mxu0 0.0
    %416 = vmatprep.subr.mxu0 0.0
    %417 = vmatpush1.msra.mxu0 0.0
    %418 = vmatprep.subr.mxu0 0.0
    %419 = vmatpush1.msra.mxu0 0.0
    %420 = vmatprep.subr.mxu0 0.0
    %421 = vmatpush1.msra.mxu0 0.0
    %422 = vmatprep.subr.mxu0 0.0
    %423 = vmatpush1.msra.mxu0 0.0
    %424 = vmatprep.subr.mxu0 0.0
    %425 = vmatpush1.msra.mxu0 0.0
    %426 = vmatprep.subr.mxu0 0.0
    %427 = vmatpush1.msra.mxu0 0.0
    %428 = vmatprep.subr.mxu0 0.0
    %429 = vmatpush1.msra.mxu0 0.0
    %430 = vmatprep.subr.mxu0 0.0
    %431 = vmatpush1.msra.mxu0 0.0
    %432 = vmatprep.subr.mxu0 0.0
    %433 = vmatpush1.msra.mxu0 0.0
    %434 = vmatprep.subr.mxu0 0.0
    %435 = vmatpush1.msra.mxu0 0.0
    %436 = vmatprep.subr.mxu0 0.0
    %437 = vmatpush1.msra.mxu0 0.0
    %438 = vmatprep.subr.mxu0 0.0
    %439 = vmatpush1.msra.mxu0 0.0
    %440 = vmatprep.subr.mxu0 0.0
    %v441 = vand.u32 %v57, 4294901760
    %v442 = vsub.f32 %v57, %v441
    %v443 = vand.u32 %v442, 4294901760
    %444 = vmatpush1.msra.mxu0 %v443
    %445 = vmatprep.subr.mxu0 0.0
    %v446 = vand.u32 %v56, 4294901760
    %v447 = vsub.f32 %v56, %v446
    %v448 = vand.u32 %v447, 4294901760
    %449 = vmatpush1.msra.mxu0 %v448
    %450 = vmatprep.subr.mxu0 0.0
    %451 = vmatpush2.msra.mxu0 0.0
    %452 = vmatprep.subr.mxu0 0.0
    %453 = vmatpush2.msra.mxu0 0.0
    %454 = vmatprep.subr.mxu0 0.0
    %455 = vmatpush2.msra.mxu0 0.0
    %456 = vmatprep.subr.mxu0 0.0
    %457 = vmatpush2.msra.mxu0 0.0
    %458 = vmatprep.subr.mxu0 0.0
    %459 = vmatpush2.msra.mxu0 0.0
    %460 = vmatprep.subr.mxu0 0.0
    %461 = vmatpush2.msra.mxu0 0.0
    %462 = vmatprep.subr.mxu0 0.0
    %463 = vmatpush2.msra.mxu0 0.0
    %464 = vmatprep.subr.mxu0 0.0
    %465 = vmatpush2.msra.mxu0 0.0
    %466 = vmatprep.subr.mxu0 0.0
    %467 = vmatpush2.msra.mxu0 0.0
    %468 = vmatprep.subr.mxu0 0.0
    %469 = vmatpush2.msra.mxu0 0.0
    %470 = vmatprep.subr.mxu0 0.0
    %471 = vmatpush2.msra.mxu0 0.0
    %472 = vmatprep.subr.mxu0 0.0
    %473 = vmatpush2.msra.mxu0 0.0
    %474 = vmatprep.subr.mxu0 0.0
    %475 = vmatpush2.msra.mxu0 0.0
    %476 = vmatprep.subr.mxu0 0.0
    %477 = vmatpush2.msra.mxu0 0.0
    %478 = vmatprep.subr.mxu0 0.0
    %479 = vmatpush2.msra.mxu0 0.0
    %480 = vmatprep.subr.mxu0 0.0
    %481 = vmatpush2.msra.mxu0 0.0
    %482 = vmatprep.mubr.f32.mxu0 0.0
    %v483 = vand.u32 %v67, 4294901760
    %484 = vmatmul.mubr.f32.gmra.mxu0 %v483
    %v485 = vpop.f32.mrf.mxu0
    %v486 = vadd.f32 %v401, %v485
    %v487 = vpop.f32.mrf.mxu0
    %488 = vmatprep.mubr.f32.mxu0 0.0
    %v489 = vand.u32 %v70, 4294901760
    %490 = vmatmul.mubr.f32.gmra.mxu0 %v489
    %v491 = vpop.f32.mrf.mxu0
    %v492 = vadd.f32 %v409, %v491
    %v493 = vpop.f32.mrf.mxu0
    %494 = vdwg.mxu0
    %495 = vmatprep.subr.mxu0 0.0
    %496 = vmatpush1.msra.mxu0 0.0
    %497 = vmatprep.subr.mxu0 0.0
    %498 = vmatpush1.msra.mxu0 0.0
    %499 = vmatprep.subr.mxu0 0.0
    %500 = vmatpush1.msra.mxu0 0.0
    %501 = vmatprep.subr.mxu0 0.0
    %502 = vmatpush1.msra.mxu0 0.0
    %503 = vmatprep.subr.mxu0 0.0
    %504 = vmatpush1.msra.mxu0 0.0
    %505 = vmatprep.subr.mxu0 0.0
    %506 = vmatpush1.msra.mxu0 0.0
    %507 = vmatprep.subr.mxu0 0.0
    %508 = vmatpush1.msra.mxu0 0.0
    %509 = vmatprep.subr.mxu0 0.0
    %510 = vmatpush1.msra.mxu0 0.0
    %511 = vmatprep.subr.mxu0 0.0
    %512 = vmatpush1.msra.mxu0 0.0
    %513 = vmatprep.subr.mxu0 0.0
    %514 = vmatpush1.msra.mxu0 0.0
    %515 = vmatprep.subr.mxu0 0.0
    %516 = vmatpush1.msra.mxu0 0.0
    %517 = vmatprep.subr.mxu0 0.0
    %518 = vmatpush1.msra.mxu0 0.0
    %519 = vmatprep.subr.mxu0 0.0
    %520 = vmatpush1.msra.mxu0 0.0
    %521 = vmatprep.subr.mxu0 0.0
    %522 = vmatpush1.msra.mxu0 0.0
    %523 = vmatprep.subr.mxu0 0.0
    %v524 = vand.u32 %v57, 4294901760
    %525 = vmatpush1.msra.mxu0 %v524
    %526 = vmatprep.subr.mxu0 0.0
    %v527 = vand.u32 %v56, 4294901760
    %528 = vmatpush1.msra.mxu0 %v527
    %529 = vmatprep.subr.mxu0 0.0
    %530 = vmatpush2.msra.mxu0 0.0
    %531 = vmatprep.subr.mxu0 0.0
    %532 = vmatpush2.msra.mxu0 0.0
    %533 = vmatprep.subr.mxu0 0.0
    %534 = vmatpush2.msra.mxu0 0.0
    %535 = vmatprep.subr.mxu0 0.0
    %536 = vmatpush2.msra.mxu0 0.0
    %537 = vmatprep.subr.mxu0 0.0
    %538 = vmatpush2.msra.mxu0 0.0
    %539 = vmatprep.subr.mxu0 0.0
    %540 = vmatpush2.msra.mxu0 0.0
    %541 = vmatprep.subr.mxu0 0.0
    %542 = vmatpush2.msra.mxu0 0.0
    %543 = vmatprep.subr.mxu0 0.0
    %544 = vmatpush2.msra.mxu0 0.0
    %545 = vmatprep.subr.mxu0 0.0
    %546 = vmatpush2.msra.mxu0 0.0
    %547 = vmatprep.subr.mxu0 0.0
    %548 = vmatpush2.msra.mxu0 0.0
    %549 = vmatprep.subr.mxu0 0.0
    %550 = vmatpush2.msra.mxu0 0.0
    %551 = vmatprep.subr.mxu0 0.0
    %552 = vmatpush2.msra.mxu0 0.0
    %553 = vmatprep.subr.mxu0 0.0
    %554 = vmatpush2.msra.mxu0 0.0
    %555 = vmatprep.subr.mxu0 0.0
    %556 = vmatpush2.msra.mxu0 0.0
    %557 = vmatprep.subr.mxu0 0.0
    %558 = vmatpush2.msra.mxu0 0.0
    %559 = vmatprep.subr.mxu0 0.0
    %560 = vmatpush2.msra.mxu0 0.0
    %561 = vmatprep.mubr.f32.mxu0 0.0
    %v562 = vand.u32 %v67, 4294901760
    %563 = vmatmul.mubr.f32.gmra.mxu0 %v562
    %v564 = vpop.f32.mrf.mxu0
    %v565 = vadd.f32 %v486, %v564
    %v566 = vpop.f32.mrf.mxu0
    %567 = vmatprep.mubr.f32.mxu0 0.0
    %v568 = vand.u32 %v70, 4294901760
    %569 = vmatmul.mubr.f32.gmra.mxu0 %v568
    %v570 = vpop.f32.mrf.mxu0
    %v571 = vadd.f32 %v492, %v570
    %v572 = vpop.f32.mrf.mxu0
    %573 = vdwg.mxu0
    %v574 = vmax.f32 %v565, 0.0
    %v575 = vmax.f32 %v571, 0.0
    %v576 = vld [vmem:[#allocation2] sm:$0xff]
    %v577 = vld [vmem:[#allocation2 + $0x8] sm:$0xff]
    %v578 = vld [vmem:[#allocation2 + $0x10] sm:$0xff]
    %v579 = vld [vmem:[#allocation2 + $0x18] sm:$0xff]
    %v580 = vld [vmem:[#allocation2 + $0x20] sm:$0xff]
    %v581 = vld [vmem:[#allocation2 + $0x28] sm:$0xff]
    %v582 = vld [vmem:[#allocation2 + $0x30] sm:$0xff]
    %v583 = vld [vmem:[#allocation2 + $0x38] sm:$0xff]
    %v584 = vld [vmem:[#allocation2 + $0x40] sm:$0xff]
    %v585 = vld [vmem:[#allocation2 + $0x48] sm:$0xff]
    %v586 = vld [vmem:[#allocation2 + $0x50] sm:$0xff]
    %v587 = vld [vmem:[#allocation2 + $0x58] sm:$0xff]
    %v588 = vld [vmem:[#allocation2 + $0x60] sm:$0xff]
    %v589 = vld [vmem:[#allocation2 + $0x68] sm:$0xff]
    %v590 = vld [vmem:[#allocation2 + $0x70] sm:$0xff]
    %v591 = vld [vmem:[#allocation2 + $0x78] sm:$0xff]
    %v592 = vld [vmem:[%s4] sm:$0x1]
    %v594 = vlaneseq
    %v595 = vshrl.u32 %v594, 7
    %v596 = vsub.s32 0, %v595
    %v597 = vrot.slane %v592, %v596
    %599 = vmatprep.subr.mxu0 0.0
    %v600 = vand.u32 %v591, 4294901760
    %601 = vmatpush1.msra.mxu0 %v600
    %602 = vmatprep.subr.mxu0 0.0
    %v603 = vand.u32 %v590, 4294901760
    %604 = vmatpush1.msra.mxu0 %v603
    %605 = vmatprep.subr.mxu0 0.0
    %v606 = vand.u32 %v589, 4294901760
    %607 = vmatpush1.msra.mxu0 %v606
    %608 = vmatprep.subr.mxu0 0.0
    %v609 = vand.u32 %v588, 4294901760
    %610 = vmatpush1.msra.mxu0 %v609
    %611 = vmatprep.subr.mxu0 0.0
    %v612 = vand.u32 %v587, 4294901760
    %613 = vmatpush1.msra.mxu0 %v612
    %614 = vmatprep.subr.mxu0 0.0
    %v615 = vand.u32 %v586, 4294901760
    %616 = vmatpush1.msra.mxu0 %v615
    %617 = vmatprep.subr.mxu0 0.0
    %v618 = vand.u32 %v585, 4294901760
    %619 = vmatpush1.msra.mxu0 %v618
    %620 = vmatprep.subr.mxu0 0.0
    %v621 = vand.u32 %v584, 4294901760
    %622 = vmatpush1.msra.mxu0 %v621
    %623 = vmatprep.subr.mxu0 0.0
    %v624 = vand.u32 %v583, 4294901760
    %625 = vmatpush1.msra.mxu0 %v624
    %626 = vmatprep.subr.mxu0 0.0
    %v627 = vand.u32 %v582, 4294901760
    %628 = vmatpush1.msra.mxu0 %v627
    %629 = vmatprep.subr.mxu0 0.0
    %v630 = vand.u32 %v581, 4294901760
    %631 = vmatpush1.msra.mxu0 %v630
    %632 = vmatprep.subr.mxu0 0.0
    %v633 = vand.u32 %v580, 4294901760
    %634 = vmatpush1.msra.mxu0 %v633
    %635 = vmatprep.subr.mxu0 0.0
    %v636 = vand.u32 %v579, 4294901760
    %637 = vmatpush1.msra.mxu0 %v636
    %638 = vmatprep.subr.mxu0 0.0
    %v639 = vand.u32 %v578, 4294901760
    %640 = vmatpush1.msra.mxu0 %v639
    %641 = vmatprep.subr.mxu0 0.0
    %v642 = vand.u32 %v577, 4294901760
    %643 = vmatpush1.msra.mxu0 %v642
    %644 = vmatprep.subr.mxu0 0.0
    %v645 = vand.u32 %v576, 4294901760
    %646 = vmatpush1.msra.mxu0 %v645
    %647 = vmatprep.subr.mxu0 0.0
    %648 = vmatpush2.msra.mxu0 0.0
    %649 = vmatprep.subr.mxu0 0.0
    %650 = vmatpush2.msra.mxu0 0.0
    %651 = vmatprep.subr.mxu0 0.0
    %652 = vmatpush2.msra.mxu0 0.0
    %653 = vmatprep.subr.mxu0 0.0
    %654 = vmatpush2.msra.mxu0 0.0
    %655 = vmatprep.subr.mxu0 0.0
    %656 = vmatpush2.msra.mxu0 0.0
    %657 = vmatprep.subr.mxu0 0.0
    %658 = vmatpush2.msra.mxu0 0.0
    %659 = vmatprep.subr.mxu0 0.0
    %660 = vmatpush2.msra.mxu0 0.0
    %661 = vmatprep.subr.mxu0 0.0
    %662 = vmatpush2.msra.mxu0 0.0
    %663 = vmatprep.subr.mxu0 0.0
    %664 = vmatpush2.msra.mxu0 0.0
    %665 = vmatprep.subr.mxu0 0.0
    %666 = vmatpush2.msra.mxu0 0.0
    %667 = vmatprep.subr.mxu0 0.0
    %668 = vmatpush2.msra.mxu0 0.0
    %669 = vmatprep.subr.mxu0 0.0
    %670 = vmatpush2.msra.mxu0 0.0
    %671 = vmatprep.subr.mxu0 0.0
    %672 = vmatpush2.msra.mxu0 0.0
    %673 = vmatprep.subr.mxu0 0.0
    %674 = vmatpush2.msra.mxu0 0.0
    %675 = vmatprep.subr.mxu0 0.0
    %676 = vmatpush2.msra.mxu0 0.0
    %677 = vmatprep.subr.mxu0 0.0
    %678 = vmatpush2.msra.mxu0 0.0
    %679 = vmatprep.mubr.f32.mxu0 0.0
    %v680 = vand.u32 %v574, 4294901760
    %v681 = vsub.f32 %v574, %v680
    %v682 = vand.u32 %v681, 4294901760
    %v683 = vsub.f32 %v681, %v682
    %v684 = vand.u32 %v683, 4294901760
    %685 = vmatmul.mubr.f32.gmra.mxu0 %v684
    %v686 = vpop.f32.mrf.mxu0
    %v687 = vadd.f32 %v597, %v686
    %v688 = vpop.f32.mrf.mxu0
    %689 = vmatprep.mubr.f32.mxu0 0.0
    %v690 = vand.u32 %v575, 4294901760
    %v691 = vsub.f32 %v575, %v690
    %v692 = vand.u32 %v691, 4294901760
    %v693 = vsub.f32 %v691, %v692
    %v694 = vand.u32 %v693, 4294901760
    %695 = vmatmul.mubr.f32.gmra.mxu0 %v694
    %v696 = vpop.f32.mrf.mxu0
    %v697 = vadd.f32 %v597, %v696
    %v698 = vpop.f32.mrf.mxu0
    %699 = vdwg.mxu0
    %700 = vmatprep.subr.mxu0 0.0
    %v701 = vand.u32 %v591, 4294901760
    %v702 = vsub.f32 %v591, %v701
    %v703 = vand.u32 %v702, 4294901760
    %v704 = vsub.f32 %v702, %v703
    %v705 = vand.u32 %v704, 4294901760
    %706 = vmatpush1.msra.mxu0 %v705
    %707 = vmatprep.subr.mxu0 0.0
    %v708 = vand.u32 %v590, 4294901760
    %v709 = vsub.f32 %v590, %v708
    %v710 = vand.u32 %v709, 4294901760
    %v711 = vsub.f32 %v709, %v710
    %v712 = vand.u32 %v711, 4294901760
    %713 = vmatpush1.msra.mxu0 %v712
    %714 = vmatprep.subr.mxu0 0.0
    %v715 = vand.u32 %v589, 4294901760
    %v716 = vsub.f32 %v589, %v715
    %v717 = vand.u32 %v716, 4294901760
    %v718 = vsub.f32 %v716, %v717
    %v719 = vand.u32 %v718, 4294901760
    %720 = vmatpush1.msra.mxu0 %v719
    %721 = vmatprep.subr.mxu0 0.0
    %v722 = vand.u32 %v588, 4294901760
    %v723 = vsub.f32 %v588, %v722
    %v724 = vand.u32 %v723, 4294901760
    %v725 = vsub.f32 %v723, %v724
    %v726 = vand.u32 %v725, 4294901760
    %727 = vmatpush1.msra.mxu0 %v726
    %728 = vmatprep.subr.mxu0 0.0
    %v729 = vand.u32 %v587, 4294901760
    %v730 = vsub.f32 %v587, %v729
    %v731 = vand.u32 %v730, 4294901760
    %v732 = vsub.f32 %v730, %v731
    %v733 = vand.u32 %v732, 4294901760
    %734 = vmatpush1.msra.mxu0 %v733
    %735 = vmatprep.subr.mxu0 0.0
    %v736 = vand.u32 %v586, 4294901760
    %v737 = vsub.f32 %v586, %v736
    %v738 = vand.u32 %v737, 4294901760
    %v739 = vsub.f32 %v737, %v738
    %v740 = vand.u32 %v739, 4294901760
    %741 = vmatpush1.msra.mxu0 %v740
    %742 = vmatprep.subr.mxu0 0.0
    %v743 = vand.u32 %v585, 4294901760
    %v744 = vsub.f32 %v585, %v743
    %v745 = vand.u32 %v744, 4294901760
    %v746 = vsub.f32 %v744, %v745
    %v747 = vand.u32 %v746, 4294901760
    %748 = vmatpush1.msra.mxu0 %v747
    %749 = vmatprep.subr.mxu0 0.0
    %v750 = vand.u32 %v584, 4294901760
    %v751 = vsub.f32 %v584, %v750
    %v752 = vand.u32 %v751, 4294901760
    %v753 = vsub.f32 %v751, %v752
    %v754 = vand.u32 %v753, 4294901760
    %755 = vmatpush1.msra.mxu0 %v754
    %756 = vmatprep.subr.mxu0 0.0
    %v757 = vand.u32 %v583, 4294901760
    %v758 = vsub.f32 %v583, %v757
    %v759 = vand.u32 %v758, 4294901760
    %v760 = vsub.f32 %v758, %v759
    %v761 = vand.u32 %v760, 4294901760
    %762 = vmatpush1.msra.mxu0 %v761
    %763 = vmatprep.subr.mxu0 0.0
    %v764 = vand.u32 %v582, 4294901760
    %v765 = vsub.f32 %v582, %v764
    %v766 = vand.u32 %v765, 4294901760
    %v767 = vsub.f32 %v765, %v766
    %v768 = vand.u32 %v767, 4294901760
    %769 = vmatpush1.msra.mxu0 %v768
    %770 = vmatprep.subr.mxu0 0.0
    %v771 = vand.u32 %v581, 4294901760
    %v772 = vsub.f32 %v581, %v771
    %v773 = vand.u32 %v772, 4294901760
    %v774 = vsub.f32 %v772, %v773
    %v775 = vand.u32 %v774, 4294901760
    %776 = vmatpush1.msra.mxu0 %v775
    %777 = vmatprep.subr.mxu0 0.0
    %v778 = vand.u32 %v580, 4294901760
    %v779 = vsub.f32 %v580, %v778
    %v780 = vand.u32 %v779, 4294901760
    %v781 = vsub.f32 %v779, %v780
    %v782 = vand.u32 %v781, 4294901760
    %783 = vmatpush1.msra.mxu0 %v782
    %784 = vmatprep.subr.mxu0 0.0
    %v785 = vand.u32 %v579, 4294901760
    %v786 = vsub.f32 %v579, %v785
    %v787 = vand.u32 %v786, 4294901760
    %v788 = vsub.f32 %v786, %v787
    %v789 = vand.u32 %v788, 4294901760
    %790 = vmatpush1.msra.mxu0 %v789
    %791 = vmatprep.subr.mxu0 0.0
    %v792 = vand.u32 %v578, 4294901760
    %v793 = vsub.f32 %v578, %v792
    %v794 = vand.u32 %v793, 4294901760
    %v795 = vsub.f32 %v793, %v794
    %v796 = vand.u32 %v795, 4294901760
    %797 = vmatpush1.msra.mxu0 %v796
    %798 = vmatprep.subr.mxu0 0.0
    %v799 = vand.u32 %v577, 4294901760
    %v800 = vsub.f32 %v577, %v799
    %v801 = vand.u32 %v800, 4294901760
    %v802 = vsub.f32 %v800, %v801
    %v803 = vand.u32 %v802, 4294901760
    %804 = vmatpush1.msra.mxu0 %v803
    %805 = vmatprep.subr.mxu0 0.0
    %v806 = vand.u32 %v576, 4294901760
    %v807 = vsub.f32 %v576, %v806
    %v808 = vand.u32 %v807, 4294901760
    %v809 = vsub.f32 %v807, %v808
    %v810 = vand.u32 %v809, 4294901760
    %811 = vmatpush1.msra.mxu0 %v810
    %812 = vmatprep.subr.mxu0 0.0
    %813 = vmatpush2.msra.mxu0 0.0
    %814 = vmatprep.subr.mxu0 0.0
    %815 = vmatpush2.msra.mxu0 0.0
    %816 = vmatprep.subr.mxu0 0.0
    %817 = vmatpush2.msra.mxu0 0.0
    %818 = vmatprep.subr.mxu0 0.0
    %819 = vmatpush2.msra.mxu0 0.0
    %820 = vmatprep.subr.mxu0 0.0
    %821 = vmatpush2.msra.mxu0 0.0
    %822 = vmatprep.subr.mxu0 0.0
    %823 = vmatpush2.msra.mxu0 0.0
    %824 = vmatprep.subr.mxu0 0.0
    %825 = vmatpush2.msra.mxu0 0.0
    %826 = vmatprep.subr.mxu0 0.0
    %827 = vmatpush2.msra.mxu0 0.0
    %828 = vmatprep.subr.mxu0 0.0
    %829 = vmatpush2.msra.mxu0 0.0
    %830 = vmatprep.subr.mxu0 0.0
    %831 = vmatpush2.msra.mxu0 0.0
    %832 = vmatprep.subr.mxu0 0.0
    %833 = vmatpush2.msra.mxu0 0.0
    %834 = vmatprep.subr.mxu0 0.0
    %835 = vmatpush2.msra.mxu0 0.0
    %836 = vmatprep.subr.mxu0 0.0
    %837 = vmatpush2.msra.mxu0 0.0
    %838 = vmatprep.subr.mxu0 0.0
    %839 = vmatpush2.msra.mxu0 0.0
    %840 = vmatprep.subr.mxu0 0.0
    %841 = vmatpush2.msra.mxu0 0.0
    %842 = vmatprep.subr.mxu0 0.0
    %843 = vmatpush2.msra.mxu0 0.0
    %844 = vmatprep.mubr.f32.mxu0 0.0
    %v845 = vand.u32 %v574, 4294901760
    %846 = vmatmul.mubr.f32.gmra.mxu0 %v845
    %v847 = vpop.f32.mrf.mxu0
    %v848 = vadd.f32 %v687, %v847
    %v849 = vpop.f32.mrf.mxu0
    %850 = vmatprep.mubr.f32.mxu0 0.0
    %v851 = vand.u32 %v575, 4294901760
    %852 = vmatmul.mubr.f32.gmra.mxu0 %v851
    %v853 = vpop.f32.mrf.mxu0
    %v854 = vadd.f32 %v697, %v853
    %v855 = vpop.f32.mrf.mxu0
    %856 = vdwg.mxu0
    %857 = vmatprep.subr.mxu0 0.0
    %v858 = vand.u32 %v591, 4294901760
    %v859 = vsub.f32 %v591, %v858
    %860 = vmatpush1.msra.mxu0 %v859
    %861 = vmatprep.subr.mxu0 0.0
    %v862 = vand.u32 %v590, 4294901760
    %v863 = vsub.f32 %v590, %v862
    %864 = vmatpush1.msra.mxu0 %v863
    %865 = vmatprep.subr.mxu0 0.0
    %v866 = vand.u32 %v589, 4294901760
    %v867 = vsub.f32 %v589, %v866
    %868 = vmatpush1.msra.mxu0 %v867
    %869 = vmatprep.subr.mxu0 0.0
    %v870 = vand.u32 %v588, 4294901760
    %v871 = vsub.f32 %v588, %v870
    %872 = vmatpush1.msra.mxu0 %v871
    %873 = vmatprep.subr.mxu0 0.0
    %v874 = vand.u32 %v587, 4294901760
    %v875 = vsub.f32 %v587, %v874
    %876 = vmatpush1.msra.mxu0 %v875
    %877 = vmatprep.subr.mxu0 0.0
    %v878 = vand.u32 %v586, 4294901760
    %v879 = vsub.f32 %v586, %v878
    %880 = vmatpush1.msra.mxu0 %v879
    %881 = vmatprep.subr.mxu0 0.0
    %v882 = vand.u32 %v585, 4294901760
    %v883 = vsub.f32 %v585, %v882
    %884 = vmatpush1.msra.mxu0 %v883
    %885 = vmatprep.subr.mxu0 0.0
    %v886 = vand.u32 %v584, 4294901760
    %v887 = vsub.f32 %v584, %v886
    %888 = vmatpush1.msra.mxu0 %v887
    %889 = vmatprep.subr.mxu0 0.0
    %v890 = vand.u32 %v583, 4294901760
    %v891 = vsub.f32 %v583, %v890
    %892 = vmatpush1.msra.mxu0 %v891
    %893 = vmatprep.subr.mxu0 0.0
    %v894 = vand.u32 %v582, 4294901760
    %v895 = vsub.f32 %v582, %v894
    %896 = vmatpush1.msra.mxu0 %v895
    %897 = vmatprep.subr.mxu0 0.0
    %v898 = vand.u32 %v581, 4294901760
    %v899 = vsub.f32 %v581, %v898
    %900 = vmatpush1.msra.mxu0 %v899
    %901 = vmatprep.subr.mxu0 0.0
    %v902 = vand.u32 %v580, 4294901760
    %v903 = vsub.f32 %v580, %v902
    %904 = vmatpush1.msra.mxu0 %v903
    %905 = vmatprep.subr.mxu0 0.0
    %v906 = vand.u32 %v579, 4294901760
    %v907 = vsub.f32 %v579, %v906
    %908 = vmatpush1.msra.mxu0 %v907
    %909 = vmatprep.subr.mxu0 0.0
    %v910 = vand.u32 %v578, 4294901760
    %v911 = vsub.f32 %v578, %v910
    %912 = vmatpush1.msra.mxu0 %v911
    %913 = vmatprep.subr.mxu0 0.0
    %v914 = vand.u32 %v577, 4294901760
    %v915 = vsub.f32 %v577, %v914
    %916 = vmatpush1.msra.mxu0 %v915
    %917 = vmatprep.subr.mxu0 0.0
    %v918 = vand.u32 %v576, 4294901760
    %v919 = vsub.f32 %v576, %v918
    %920 = vmatpush1.msra.mxu0 %v919
    %921 = vmatprep.subr.mxu0 0.0
    %922 = vmatpush2.msra.mxu0 0.0
    %923 = vmatprep.subr.mxu0 0.0
    %924 = vmatpush2.msra.mxu0 0.0
    %925 = vmatprep.subr.mxu0 0.0
    %926 = vmatpush2.msra.mxu0 0.0
    %927 = vmatprep.subr.mxu0 0.0
    %928 = vmatpush2.msra.mxu0 0.0
    %929 = vmatprep.subr.mxu0 0.0
    %930 = vmatpush2.msra.mxu0 0.0
    %931 = vmatprep.subr.mxu0 0.0
    %932 = vmatpush2.msra.mxu0 0.0
    %933 = vmatprep.subr.mxu0 0.0
    %934 = vmatpush2.msra.mxu0 0.0
    %935 = vmatprep.subr.mxu0 0.0
    %936 = vmatpush2.msra.mxu0 0.0
    %937 = vmatprep.subr.mxu0 0.0
    %938 = vmatpush2.msra.mxu0 0.0
    %939 = vmatprep.subr.mxu0 0.0
    %940 = vmatpush2.msra.mxu0 0.0
    %941 = vmatprep.subr.mxu0 0.0
    %942 = vmatpush2.msra.mxu0 0.0
    %943 = vmatprep.subr.mxu0 0.0
    %944 = vmatpush2.msra.mxu0 0.0
    %945 = vmatprep.subr.mxu0 0.0
    %946 = vmatpush2.msra.mxu0 0.0
    %947 = vmatprep.subr.mxu0 0.0
    %948 = vmatpush2.msra.mxu0 0.0
    %949 = vmatprep.subr.mxu0 0.0
    %950 = vmatpush2.msra.mxu0 0.0
    %951 = vmatprep.subr.mxu0 0.0
    %952 = vmatpush2.msra.mxu0 0.0
    %953 = vmatprep.mubr.f32.mxu0 0.0
    %v954 = vand.u32 %v574, 4294901760
    %v955 = vsub.f32 %v574, %v954
    %956 = vmatmul.mubr.f32.gmra.mxu0 %v955
    %v957 = vpop.f32.mrf.mxu0
    %v958 = vadd.f32 %v848, %v957
    %v959 = vpop.f32.mrf.mxu0
    %960 = vmatprep.mubr.f32.mxu0 0.0
    %v961 = vand.u32 %v575, 4294901760
    %v962 = vsub.f32 %v575, %v961
    %963 = vmatmul.mubr.f32.gmra.mxu0 %v962
    %v964 = vpop.f32.mrf.mxu0
    %v965 = vadd.f32 %v854, %v964
    %v966 = vpop.f32.mrf.mxu0
    %967 = vdwg.mxu0
    %968 = vmatprep.subr.mxu0 0.0
    %v969 = vand.u32 %v591, 4294901760
    %970 = vmatpush1.msra.mxu0 %v969
    %971 = vmatprep.subr.mxu0 0.0
    %v972 = vand.u32 %v590, 4294901760
    %973 = vmatpush1.msra.mxu0 %v972
    %974 = vmatprep.subr.mxu0 0.0
    %v975 = vand.u32 %v589, 4294901760
    %976 = vmatpush1.msra.mxu0 %v975
    %977 = vmatprep.subr.mxu0 0.0
    %v978 = vand.u32 %v588, 4294901760
    %979 = vmatpush1.msra.mxu0 %v978
    %980 = vmatprep.subr.mxu0 0.0
    %v981 = vand.u32 %v587, 4294901760
    %982 = vmatpush1.msra.mxu0 %v981
    %983 = vmatprep.subr.mxu0 0.0
    %v984 = vand.u32 %v586, 4294901760
    %985 = vmatpush1.msra.mxu0 %v984
    %986 = vmatprep.subr.mxu0 0.0
    %v987 = vand.u32 %v585, 4294901760
    %988 = vmatpush1.msra.mxu0 %v987
    %989 = vmatprep.subr.mxu0 0.0
    %v990 = vand.u32 %v584, 4294901760
    %991 = vmatpush1.msra.mxu0 %v990
    %992 = vmatprep.subr.mxu0 0.0
    %v993 = vand.u32 %v583, 4294901760
    %994 = vmatpush1.msra.mxu0 %v993
    %995 = vmatprep.subr.mxu0 0.0
    %v996 = vand.u32 %v582, 4294901760
    %997 = vmatpush1.msra.mxu0 %v996
    %998 = vmatprep.subr.mxu0 0.0
    %v999 = vand.u32 %v581, 4294901760
    %1000 = vmatpush1.msra.mxu0 %v999
    %1001 = vmatprep.subr.mxu0 0.0
    %v1002 = vand.u32 %v580, 4294901760
    %1003 = vmatpush1.msra.mxu0 %v1002
    %1004 = vmatprep.subr.mxu0 0.0
    %v1005 = vand.u32 %v579, 4294901760
    %1006 = vmatpush1.msra.mxu0 %v1005
    %1007 = vmatprep.subr.mxu0 0.0
    %v1008 = vand.u32 %v578, 4294901760
    %1009 = vmatpush1.msra.mxu0 %v1008
    %1010 = vmatprep.subr.mxu0 0.0
    %v1011 = vand.u32 %v577, 4294901760
    %1012 = vmatpush1.msra.mxu0 %v1011
    %1013 = vmatprep.subr.mxu0 0.0
    %v1014 = vand.u32 %v576, 4294901760
    %1015 = vmatpush1.msra.mxu0 %v1014
    %1016 = vmatprep.subr.mxu0 0.0
    %1017 = vmatpush2.msra.mxu0 0.0
    %1018 = vmatprep.subr.mxu0 0.0
    %1019 = vmatpush2.msra.mxu0 0.0
    %1020 = vmatprep.subr.mxu0 0.0
    %1021 = vmatpush2.msra.mxu0 0.0
    %1022 = vmatprep.subr.mxu0 0.0
    %1023 = vmatpush2.msra.mxu0 0.0
    %1024 = vmatprep.subr.mxu0 0.0
    %1025 = vmatpush2.msra.mxu0 0.0
    %1026 = vmatprep.subr.mxu0 0.0
    %1027 = vmatpush2.msra.mxu0 0.0
    %1028 = vmatprep.subr.mxu0 0.0
    %1029 = vmatpush2.msra.mxu0 0.0
    %1030 = vmatprep.subr.mxu0 0.0
    %1031 = vmatpush2.msra.mxu0 0.0
    %1032 = vmatprep.subr.mxu0 0.0
    %1033 = vmatpush2.msra.mxu0 0.0
    %1034 = vmatprep.subr.mxu0 0.0
    %1035 = vmatpush2.msra.mxu0 0.0
    %1036 = vmatprep.subr.mxu0 0.0
    %1037 = vmatpush2.msra.mxu0 0.0
    %1038 = vmatprep.subr.mxu0 0.0
    %1039 = vmatpush2.msra.mxu0 0.0
    %1040 = vmatprep.subr.mxu0 0.0
    %1041 = vmatpush2.msra.mxu0 0.0
    %1042 = vmatprep.subr.mxu0 0.0
    %1043 = vmatpush2.msra.mxu0 0.0
    %1044 = vmatprep.subr.mxu0 0.0
    %1045 = vmatpush2.msra.mxu0 0.0
    %1046 = vmatprep.subr.mxu0 0.0
    %1047 = vmatpush2.msra.mxu0 0.0
    %1048 = vmatprep.mubr.f32.mxu0 0.0
    %v1049 = vand.u32 %v574, 4294901760
    %v1050 = vsub.f32 %v574, %v1049
    %v1051 = vand.u32 %v1050, 4294901760
    %1052 = vmatmul.mubr.f32.gmra.mxu0 %v1051
    %v1053 = vpop.f32.mrf.mxu0
    %v1054 = vadd.f32 %v958, %v1053
    %v1055 = vpop.f32.mrf.mxu0
    %1056 = vmatprep.mubr.f32.mxu0 0.0
    %v1057 = vand.u32 %v575, 4294901760
    %v1058 = vsub.f32 %v575, %v1057
    %v1059 = vand.u32 %v1058, 4294901760
    %1060 = vmatmul.mubr.f32.gmra.mxu0 %v1059
    %v1061 = vpop.f32.mrf.mxu0
    %v1062 = vadd.f32 %v965, %v1061
    %v1063 = vpop.f32.mrf.mxu0
    %1064 = vdwg.mxu0
    %1065 = vmatprep.subr.mxu0 0.0
    %v1066 = vand.u32 %v591, 4294901760
    %v1067 = vsub.f32 %v591, %v1066
    %v1068 = vand.u32 %v1067, 4294901760
    %1069 = vmatpush1.msra.mxu0 %v1068
    %1070 = vmatprep.subr.mxu0 0.0
    %v1071 = vand.u32 %v590, 4294901760
    %v1072 = vsub.f32 %v590, %v1071
    %v1073 = vand.u32 %v1072, 4294901760
    %1074 = vmatpush1.msra.mxu0 %v1073
    %1075 = vmatprep.subr.mxu0 0.0
    %v1076 = vand.u32 %v589, 4294901760
    %v1077 = vsub.f32 %v589, %v1076
    %v1078 = vand.u32 %v1077, 4294901760
    %1079 = vmatpush1.msra.mxu0 %v1078
    %1080 = vmatprep.subr.mxu0 0.0
    %v1081 = vand.u32 %v588, 4294901760
    %v1082 = vsub.f32 %v588, %v1081
    %v1083 = vand.u32 %v1082, 4294901760
    %1084 = vmatpush1.msra.mxu0 %v1083
    %1085 = vmatprep.subr.mxu0 0.0
    %v1086 = vand.u32 %v587, 4294901760
    %v1087 = vsub.f32 %v587, %v1086
    %v1088 = vand.u32 %v1087, 4294901760
    %1089 = vmatpush1.msra.mxu0 %v1088
    %1090 = vmatprep.subr.mxu0 0.0
    %v1091 = vand.u32 %v586, 4294901760
    %v1092 = vsub.f32 %v586, %v1091
    %v1093 = vand.u32 %v1092, 4294901760
    %1094 = vmatpush1.msra.mxu0 %v1093
    %1095 = vmatprep.subr.mxu0 0.0
    %v1096 = vand.u32 %v585, 4294901760
    %v1097 = vsub.f32 %v585, %v1096
    %v1098 = vand.u32 %v1097, 4294901760
    %1099 = vmatpush1.msra.mxu0 %v1098
    %1100 = vmatprep.subr.mxu0 0.0
    %v1101 = vand.u32 %v584, 4294901760
    %v1102 = vsub.f32 %v584, %v1101
    %v1103 = vand.u32 %v1102, 4294901760
    %1104 = vmatpush1.msra.mxu0 %v1103
    %1105 = vmatprep.subr.mxu0 0.0
    %v1106 = vand.u32 %v583, 4294901760
    %v1107 = vsub.f32 %v583, %v1106
    %v1108 = vand.u32 %v1107, 4294901760
    %1109 = vmatpush1.msra.mxu0 %v1108
    %1110 = vmatprep.subr.mxu0 0.0
    %v1111 = vand.u32 %v582, 4294901760
    %v1112 = vsub.f32 %v582, %v1111
    %v1113 = vand.u32 %v1112, 4294901760
    %1114 = vmatpush1.msra.mxu0 %v1113
    %1115 = vmatprep.subr.mxu0 0.0
    %v1116 = vand.u32 %v581, 4294901760
    %v1117 = vsub.f32 %v581, %v1116
    %v1118 = vand.u32 %v1117, 4294901760
    %1119 = vmatpush1.msra.mxu0 %v1118
    %1120 = vmatprep.subr.mxu0 0.0
    %v1121 = vand.u32 %v580, 4294901760
    %v1122 = vsub.f32 %v580, %v1121
    %v1123 = vand.u32 %v1122, 4294901760
    %1124 = vmatpush1.msra.mxu0 %v1123
    %1125 = vmatprep.subr.mxu0 0.0
    %v1126 = vand.u32 %v579, 4294901760
    %v1127 = vsub.f32 %v579, %v1126
    %v1128 = vand.u32 %v1127, 4294901760
    %1129 = vmatpush1.msra.mxu0 %v1128
    %1130 = vmatprep.subr.mxu0 0.0
    %v1131 = vand.u32 %v578, 4294901760
    %v1132 = vsub.f32 %v578, %v1131
    %v1133 = vand.u32 %v1132, 4294901760
    %1134 = vmatpush1.msra.mxu0 %v1133
    %1135 = vmatprep.subr.mxu0 0.0
    %v1136 = vand.u32 %v577, 4294901760
    %v1137 = vsub.f32 %v577, %v1136
    %v1138 = vand.u32 %v1137, 4294901760
    %1139 = vmatpush1.msra.mxu0 %v1138
    %1140 = vmatprep.subr.mxu0 0.0
    %v1141 = vand.u32 %v576, 4294901760
    %v1142 = vsub.f32 %v576, %v1141
    %v1143 = vand.u32 %v1142, 4294901760
    %1144 = vmatpush1.msra.mxu0 %v1143
    %1145 = vmatprep.subr.mxu0 0.0
    %1146 = vmatpush2.msra.mxu0 0.0
    %1147 = vmatprep.subr.mxu0 0.0
    %1148 = vmatpush2.msra.mxu0 0.0
    %1149 = vmatprep.subr.mxu0 0.0
    %1150 = vmatpush2.msra.mxu0 0.0
    %1151 = vmatprep.subr.mxu0 0.0
    %1152 = vmatpush2.msra.mxu0 0.0
    %1153 = vmatprep.subr.mxu0 0.0
    %1154 = vmatpush2.msra.mxu0 0.0
    %1155 = vmatprep.subr.mxu0 0.0
    %1156 = vmatpush2.msra.mxu0 0.0
    %1157 = vmatprep.subr.mxu0 0.0
    %1158 = vmatpush2.msra.mxu0 0.0
    %1159 = vmatprep.subr.mxu0 0.0
    %1160 = vmatpush2.msra.mxu0 0.0
    %1161 = vmatprep.subr.mxu0 0.0
    %1162 = vmatpush2.msra.mxu0 0.0
    %1163 = vmatprep.subr.mxu0 0.0
    %1164 = vmatpush2.msra.mxu0 0.0
    %1165 = vmatprep.subr.mxu0 0.0
    %1166 = vmatpush2.msra.mxu0 0.0
    %1167 = vmatprep.subr.mxu0 0.0
    %1168 = vmatpush2.msra.mxu0 0.0
    %1169 = vmatprep.subr.mxu0 0.0
    %1170 = vmatpush2.msra.mxu0 0.0
    %1171 = vmatprep.subr.mxu0 0.0
    %1172 = vmatpush2.msra.mxu0 0.0
    %1173 = vmatprep.subr.mxu0 0.0
    %1174 = vmatpush2.msra.mxu0 0.0
    %1175 = vmatprep.subr.mxu0 0.0
    %1176 = vmatpush2.msra.mxu0 0.0
    %1177 = vmatprep.mubr.f32.mxu0 0.0
    %v1178 = vand.u32 %v574, 4294901760
    %1179 = vmatmul.mubr.f32.gmra.mxu0 %v1178
    %v1180 = vpop.f32.mrf.mxu0
    %v1181 = vadd.f32 %v1054, %v1180
    %v1182 = vpop.f32.mrf.mxu0
    %1183 = vmatprep.mubr.f32.mxu0 0.0
    %v1184 = vand.u32 %v575, 4294901760
    %1185 = vmatmul.mubr.f32.gmra.mxu0 %v1184
    %v1186 = vpop.f32.mrf.mxu0
    %v1187 = vadd.f32 %v1062, %v1186
    %v1188 = vpop.f32.mrf.mxu0
    %1189 = vdwg.mxu0
    %1190 = vmatprep.subr.mxu0 0.0
    %v1191 = vand.u32 %v591, 4294901760
    %1192 = vmatpush1.msra.mxu0 %v1191
    %1193 = vmatprep.subr.mxu0 0.0
    %v1194 = vand.u32 %v590, 4294901760
    %1195 = vmatpush1.msra.mxu0 %v1194
    %1196 = vmatprep.subr.mxu0 0.0
    %v1197 = vand.u32 %v589, 4294901760
    %1198 = vmatpush1.msra.mxu0 %v1197
    %1199 = vmatprep.subr.mxu0 0.0
    %v1200 = vand.u32 %v588, 4294901760
    %1201 = vmatpush1.msra.mxu0 %v1200
    %1202 = vmatprep.subr.mxu0 0.0
    %v1203 = vand.u32 %v587, 4294901760
    %1204 = vmatpush1.msra.mxu0 %v1203
    %1205 = vmatprep.subr.mxu0 0.0
    %v1206 = vand.u32 %v586, 4294901760
    %1207 = vmatpush1.msra.mxu0 %v1206
    %1208 = vmatprep.subr.mxu0 0.0
    %v1209 = vand.u32 %v585, 4294901760
    %1210 = vmatpush1.msra.mxu0 %v1209
    %1211 = vmatprep.subr.mxu0 0.0
    %v1212 = vand.u32 %v584, 4294901760
    %1213 = vmatpush1.msra.mxu0 %v1212
    %1214 = vmatprep.subr.mxu0 0.0
    %v1215 = vand.u32 %v583, 4294901760
    %1216 = vmatpush1.msra.mxu0 %v1215
    %1217 = vmatprep.subr.mxu0 0.0
    %v1218 = vand.u32 %v582, 4294901760
    %1219 = vmatpush1.msra.mxu0 %v1218
    %1220 = vmatprep.subr.mxu0 0.0
    %v1221 = vand.u32 %v581, 4294901760
    %1222 = vmatpush1.msra.mxu0 %v1221
    %1223 = vmatprep.subr.mxu0 0.0
    %v1224 = vand.u32 %v580, 4294901760
    %1225 = vmatpush1.msra.mxu0 %v1224
    %1226 = vmatprep.subr.mxu0 0.0
    %v1227 = vand.u32 %v579, 4294901760
    %1228 = vmatpush1.msra.mxu0 %v1227
    %1229 = vmatprep.subr.mxu0 0.0
    %v1230 = vand.u32 %v578, 4294901760
    %1231 = vmatpush1.msra.mxu0 %v1230
    %1232 = vmatprep.subr.mxu0 0.0
    %v1233 = vand.u32 %v577, 4294901760
    %1234 = vmatpush1.msra.mxu0 %v1233
    %1235 = vmatprep.subr.mxu0 0.0
    %v1236 = vand.u32 %v576, 4294901760
    %1237 = vmatpush1.msra.mxu0 %v1236
    %1238 = vmatprep.subr.mxu0 0.0
    %1239 = vmatpush2.msra.mxu0 0.0
    %1240 = vmatprep.subr.mxu0 0.0
    %1241 = vmatpush2.msra.mxu0 0.0
    %1242 = vmatprep.subr.mxu0 0.0
    %1243 = vmatpush2.msra.mxu0 0.0
    %1244 = vmatprep.subr.mxu0 0.0
    %1245 = vmatpush2.msra.mxu0 0.0
    %1246 = vmatprep.subr.mxu0 0.0
    %1247 = vmatpush2.msra.mxu0 0.0
    %1248 = vmatprep.subr.mxu0 0.0
    %1249 = vmatpush2.msra.mxu0 0.0
    %1250 = vmatprep.subr.mxu0 0.0
    %1251 = vmatpush2.msra.mxu0 0.0
    %1252 = vmatprep.subr.mxu0 0.0
    %1253 = vmatpush2.msra.mxu0 0.0
    %1254 = vmatprep.subr.mxu0 0.0
    %1255 = vmatpush2.msra.mxu0 0.0
    %1256 = vmatprep.subr.mxu0 0.0
    %1257 = vmatpush2.msra.mxu0 0.0
    %1258 = vmatprep.subr.mxu0 0.0
    %1259 = vmatpush2.msra.mxu0 0.0
    %1260 = vmatprep.subr.mxu0 0.0
    %1261 = vmatpush2.msra.mxu0 0.0
    %1262 = vmatprep.subr.mxu0 0.0
    %1263 = vmatpush2.msra.mxu0 0.0
    %1264 = vmatprep.subr.mxu0 0.0
    %1265 = vmatpush2.msra.mxu0 0.0
    %1266 = vmatprep.subr.mxu0 0.0
    %1267 = vmatpush2.msra.mxu0 0.0
    %1268 = vmatprep.subr.mxu0 0.0
    %1269 = vmatpush2.msra.mxu0 0.0
    %1270 = vmatprep.mubr.f32.mxu0 0.0
    %v1271 = vand.u32 %v574, 4294901760
    %1272 = vmatmul.mubr.f32.gmra.mxu0 %v1271
    %v1273 = vpop.f32.mrf.mxu0
    %v1274 = vadd.f32 %v1181, %v1273
    %v1275 = vpop.f32.mrf.mxu0
    %1276 = vmatprep.mubr.f32.mxu0 0.0
    %v1277 = vand.u32 %v575, 4294901760
    %1278 = vmatmul.mubr.f32.gmra.mxu0 %v1277
    %v1279 = vpop.f32.mrf.mxu0
    %v1280 = vadd.f32 %v1187, %v1279
    %v1281 = vpop.f32.mrf.mxu0
    %1282 = vdwg.mxu0
    %v1283 = vmax.f32 %v1274, 0.0
    %v1284 = vmax.f32 %v1280, 0.0
    %v1285 = vld [vmem:[#allocation4] sm:$0xff]
    %v1286 = vld [vmem:[#allocation4 + $0x8] sm:$0xff]
    %v1287 = vld [vmem:[#allocation4 + $0x10] sm:$0xff]
    %v1288 = vld [vmem:[#allocation4 + $0x18] sm:$0xff]
    %v1289 = vld [vmem:[#allocation4 + $0x20] sm:$0xff]
    %v1290 = vld [vmem:[#allocation4 + $0x28] sm:$0xff]
    %v1291 = vld [vmem:[#allocation4 + $0x30] sm:$0xff]
    %v1292 = vld [vmem:[#allocation4 + $0x38] sm:$0xff]
    %v1293 = vld [vmem:[#allocation4 + $0x40] sm:$0xff]
    %v1294 = vld [vmem:[#allocation4 + $0x48] sm:$0xff]
    %v1295 = vld [vmem:[#allocation4 + $0x50] sm:$0xff]
    %v1296 = vld [vmem:[#allocation4 + $0x58] sm:$0xff]
    %v1297 = vld [vmem:[#allocation4 + $0x60] sm:$0xff]
    %v1298 = vld [vmem:[#allocation4 + $0x68] sm:$0xff]
    %v1299 = vld [vmem:[#allocation4 + $0x70] sm:$0xff]
    %v1300 = vld [vmem:[#allocation4 + $0x78] sm:$0xff]
    %v1301 = vld [vmem:[%s6] sm:$0x1]
    %v1303 = vlaneseq
    %v1304 = vshrl.u32 %v1303, 7
    %v1305 = vsub.s32 0, %v1304
    %v1306 = vrot.slane %v1301, %v1305
    %1308 = vmatprep.subr.mxu0 0.0
    %v1309 = vand.u32 %v1300, 4294901760
    %1310 = vmatpush1.msra.mxu0 %v1309
    %1311 = vmatprep.subr.mxu0 0.0
    %v1312 = vand.u32 %v1299, 4294901760
    %1313 = vmatpush1.msra.mxu0 %v1312
    %1314 = vmatprep.subr.mxu0 0.0
    %v1315 = vand.u32 %v1298, 4294901760
    %1316 = vmatpush1.msra.mxu0 %v1315
    %1317 = vmatprep.subr.mxu0 0.0
    %v1318 = vand.u32 %v1297, 4294901760
    %1319 = vmatpush1.msra.mxu0 %v1318
    %1320 = vmatprep.subr.mxu0 0.0
    %v1321 = vand.u32 %v1296, 4294901760
    %1322 = vmatpush1.msra.mxu0 %v1321
    %1323 = vmatprep.subr.mxu0 0.0
    %v1324 = vand.u32 %v1295, 4294901760
    %1325 = vmatpush1.msra.mxu0 %v1324
    %1326 = vmatprep.subr.mxu0 0.0
    %v1327 = vand.u32 %v1294, 4294901760
    %1328 = vmatpush1.msra.mxu0 %v1327
    %1329 = vmatprep.subr.mxu0 0.0
    %v1330 = vand.u32 %v1293, 4294901760
    %1331 = vmatpush1.msra.mxu0 %v1330
    %1332 = vmatprep.subr.mxu0 0.0
    %v1333 = vand.u32 %v1292, 4294901760
    %1334 = vmatpush1.msra.mxu0 %v1333
    %1335 = vmatprep.subr.mxu0 0.0
    %v1336 = vand.u32 %v1291, 4294901760
    %1337 = vmatpush1.msra.mxu0 %v1336
    %1338 = vmatprep.subr.mxu0 0.0
    %v1339 = vand.u32 %v1290, 4294901760
    %1340 = vmatpush1.msra.mxu0 %v1339
    %1341 = vmatprep.subr.mxu0 0.0
    %v1342 = vand.u32 %v1289, 4294901760
    %1343 = vmatpush1.msra.mxu0 %v1342
    %1344 = vmatprep.subr.mxu0 0.0
    %v1345 = vand.u32 %v1288, 4294901760
    %1346 = vmatpush1.msra.mxu0 %v1345
    %1347 = vmatprep.subr.mxu0 0.0
    %v1348 = vand.u32 %v1287, 4294901760
    %1349 = vmatpush1.msra.mxu0 %v1348
    %1350 = vmatprep.subr.mxu0 0.0
    %v1351 = vand.u32 %v1286, 4294901760
    %1352 = vmatpush1.msra.mxu0 %v1351
    %1353 = vmatprep.subr.mxu0 0.0
    %v1354 = vand.u32 %v1285, 4294901760
    %1355 = vmatpush1.msra.mxu0 %v1354
    %1356 = vmatprep.subr.mxu0 0.0
    %1357 = vmatpush2.msra.mxu0 0.0
    %1358 = vmatprep.subr.mxu0 0.0
    %1359 = vmatpush2.msra.mxu0 0.0
    %1360 = vmatprep.subr.mxu0 0.0
    %1361 = vmatpush2.msra.mxu0 0.0
    %1362 = vmatprep.subr.mxu0 0.0
    %1363 = vmatpush2.msra.mxu0 0.0
    %1364 = vmatprep.subr.mxu0 0.0
    %1365 = vmatpush2.msra.mxu0 0.0
    %1366 = vmatprep.subr.mxu0 0.0
    %1367 = vmatpush2.msra.mxu0 0.0
    %1368 = vmatprep.subr.mxu0 0.0
    %1369 = vmatpush2.msra.mxu0 0.0
    %1370 = vmatprep.subr.mxu0 0.0
    %1371 = vmatpush2.msra.mxu0 0.0
    %1372 = vmatprep.subr.mxu0 0.0
    %1373 = vmatpush2.msra.mxu0 0.0
    %1374 = vmatprep.subr.mxu0 0.0
    %1375 = vmatpush2.msra.mxu0 0.0
    %1376 = vmatprep.subr.mxu0 0.0
    %1377 = vmatpush2.msra.mxu0 0.0
    %1378 = vmatprep.subr.mxu0 0.0
    %1379 = vmatpush2.msra.mxu0 0.0
    %1380 = vmatprep.subr.mxu0 0.0
    %1381 = vmatpush2.msra.mxu0 0.0
    %1382 = vmatprep.subr.mxu0 0.0
    %1383 = vmatpush2.msra.mxu0 0.0
    %1384 = vmatprep.subr.mxu0 0.0
    %1385 = vmatpush2.msra.mxu0 0.0
    %1386 = vmatprep.subr.mxu0 0.0
    %1387 = vmatpush2.msra.mxu0 0.0
    %1388 = vmatprep.mubr.f32.mxu0 0.0
    %v1389 = vand.u32 %v1283, 4294901760
    %v1390 = vsub.f32 %v1283, %v1389
    %v1391 = vand.u32 %v1390, 4294901760
    %v1392 = vsub.f32 %v1390, %v1391
    %v1393 = vand.u32 %v1392, 4294901760
    %1394 = vmatmul.mubr.f32.gmra.mxu0 %v1393
    %v1395 = vpop.f32.mrf.mxu0
    %v1396 = vadd.f32 %v1306, %v1395
    %v1397 = vpop.f32.mrf.mxu0
    %1398 = vmatprep.mubr.f32.mxu0 0.0
    %v1399 = vand.u32 %v1284, 4294901760
    %v1400 = vsub.f32 %v1284, %v1399
    %v1401 = vand.u32 %v1400, 4294901760
    %v1402 = vsub.f32 %v1400, %v1401
    %v1403 = vand.u32 %v1402, 4294901760
    %1404 = vmatmul.mubr.f32.gmra.mxu0 %v1403
    %v1405 = vpop.f32.mrf.mxu0
    %v1406 = vadd.f32 %v1306, %v1405
    %v1407 = vpop.f32.mrf.mxu0
    %1408 = vdwg.mxu0
    %1409 = vmatprep.subr.mxu0 0.0
    %v1410 = vand.u32 %v1300, 4294901760
    %v1411 = vsub.f32 %v1300, %v1410
    %v1412 = vand.u32 %v1411, 4294901760
    %v1413 = vsub.f32 %v1411, %v1412
    %v1414 = vand.u32 %v1413, 4294901760
    %1415 = vmatpush1.msra.mxu0 %v1414
    %1416 = vmatprep.subr.mxu0 0.0
    %v1417 = vand.u32 %v1299, 4294901760
    %v1418 = vsub.f32 %v1299, %v1417
    %v1419 = vand.u32 %v1418, 4294901760
    %v1420 = vsub.f32 %v1418, %v1419
    %v1421 = vand.u32 %v1420, 4294901760
    %1422 = vmatpush1.msra.mxu0 %v1421
    %1423 = vmatprep.subr.mxu0 0.0
    %v1424 = vand.u32 %v1298, 4294901760
    %v1425 = vsub.f32 %v1298, %v1424
    %v1426 = vand.u32 %v1425, 4294901760
    %v1427 = vsub.f32 %v1425, %v1426
    %v1428 = vand.u32 %v1427, 4294901760
    %1429 = vmatpush1.msra.mxu0 %v1428
    %1430 = vmatprep.subr.mxu0 0.0
    %v1431 = vand.u32 %v1297, 4294901760
    %v1432 = vsub.f32 %v1297, %v1431
    %v1433 = vand.u32 %v1432, 4294901760
    %v1434 = vsub.f32 %v1432, %v1433
    %v1435 = vand.u32 %v1434, 4294901760
    %1436 = vmatpush1.msra.mxu0 %v1435
    %1437 = vmatprep.subr.mxu0 0.0
    %v1438 = vand.u32 %v1296, 4294901760
    %v1439 = vsub.f32 %v1296, %v1438
    %v1440 = vand.u32 %v1439, 4294901760
    %v1441 = vsub.f32 %v1439, %v1440
    %v1442 = vand.u32 %v1441, 4294901760
    %1443 = vmatpush1.msra.mxu0 %v1442
    %1444 = vmatprep.subr.mxu0 0.0
    %v1445 = vand.u32 %v1295, 4294901760
    %v1446 = vsub.f32 %v1295, %v1445
    %v1447 = vand.u32 %v1446, 4294901760
    %v1448 = vsub.f32 %v1446, %v1447
    %v1449 = vand.u32 %v1448, 4294901760
    %1450 = vmatpush1.msra.mxu0 %v1449
    %1451 = vmatprep.subr.mxu0 0.0
    %v1452 = vand.u32 %v1294, 4294901760
    %v1453 = vsub.f32 %v1294, %v1452
    %v1454 = vand.u32 %v1453, 4294901760
    %v1455 = vsub.f32 %v1453, %v1454
    %v1456 = vand.u32 %v1455, 4294901760
    %1457 = vmatpush1.msra.mxu0 %v1456
    %1458 = vmatprep.subr.mxu0 0.0
    %v1459 = vand.u32 %v1293, 4294901760
    %v1460 = vsub.f32 %v1293, %v1459
    %v1461 = vand.u32 %v1460, 4294901760
    %v1462 = vsub.f32 %v1460, %v1461
    %v1463 = vand.u32 %v1462, 4294901760
    %1464 = vmatpush1.msra.mxu0 %v1463
    %1465 = vmatprep.subr.mxu0 0.0
    %v1466 = vand.u32 %v1292, 4294901760
    %v1467 = vsub.f32 %v1292, %v1466
    %v1468 = vand.u32 %v1467, 4294901760
    %v1469 = vsub.f32 %v1467, %v1468
    %v1470 = vand.u32 %v1469, 4294901760
    %1471 = vmatpush1.msra.mxu0 %v1470
    %1472 = vmatprep.subr.mxu0 0.0
    %v1473 = vand.u32 %v1291, 4294901760
    %v1474 = vsub.f32 %v1291, %v1473
    %v1475 = vand.u32 %v1474, 4294901760
    %v1476 = vsub.f32 %v1474, %v1475
    %v1477 = vand.u32 %v1476, 4294901760
    %1478 = vmatpush1.msra.mxu0 %v1477
    %1479 = vmatprep.subr.mxu0 0.0
    %v1480 = vand.u32 %v1290, 4294901760
    %v1481 = vsub.f32 %v1290, %v1480
    %v1482 = vand.u32 %v1481, 4294901760
    %v1483 = vsub.f32 %v1481, %v1482
    %v1484 = vand.u32 %v1483, 4294901760
    %1485 = vmatpush1.msra.mxu0 %v1484
    %1486 = vmatprep.subr.mxu0 0.0
    %v1487 = vand.u32 %v1289, 4294901760
    %v1488 = vsub.f32 %v1289, %v1487
    %v1489 = vand.u32 %v1488, 4294901760
    %v1490 = vsub.f32 %v1488, %v1489
    %v1491 = vand.u32 %v1490, 4294901760
    %1492 = vmatpush1.msra.mxu0 %v1491
    %1493 = vmatprep.subr.mxu0 0.0
    %v1494 = vand.u32 %v1288, 4294901760
    %v1495 = vsub.f32 %v1288, %v1494
    %v1496 = vand.u32 %v1495, 4294901760
    %v1497 = vsub.f32 %v1495, %v1496
    %v1498 = vand.u32 %v1497, 4294901760
    %1499 = vmatpush1.msra.mxu0 %v1498
    %1500 = vmatprep.subr.mxu0 0.0
    %v1501 = vand.u32 %v1287, 4294901760
    %v1502 = vsub.f32 %v1287, %v1501
    %v1503 = vand.u32 %v1502, 4294901760
    %v1504 = vsub.f32 %v1502, %v1503
    %v1505 = vand.u32 %v1504, 4294901760
    %1506 = vmatpush1.msra.mxu0 %v1505
    %1507 = vmatprep.subr.mxu0 0.0
    %v1508 = vand.u32 %v1286, 4294901760
    %v1509 = vsub.f32 %v1286, %v1508
    %v1510 = vand.u32 %v1509, 4294901760
    %v1511 = vsub.f32 %v1509, %v1510
    %v1512 = vand.u32 %v1511, 4294901760
    %1513 = vmatpush1.msra.mxu0 %v1512
    %1514 = vmatprep.subr.mxu0 0.0
    %v1515 = vand.u32 %v1285, 4294901760
    %v1516 = vsub.f32 %v1285, %v1515
    %v1517 = vand.u32 %v1516, 4294901760
    %v1518 = vsub.f32 %v1516, %v1517
    %v1519 = vand.u32 %v1518, 4294901760
    %1520 = vmatpush1.msra.mxu0 %v1519
    %1521 = vmatprep.subr.mxu0 0.0
    %1522 = vmatpush2.msra.mxu0 0.0
    %1523 = vmatprep.subr.mxu0 0.0
    %1524 = vmatpush2.msra.mxu0 0.0
    %1525 = vmatprep.subr.mxu0 0.0
    %1526 = vmatpush2.msra.mxu0 0.0
    %1527 = vmatprep.subr.mxu0 0.0
    %1528 = vmatpush2.msra.mxu0 0.0
    %1529 = vmatprep.subr.mxu0 0.0
    %1530 = vmatpush2.msra.mxu0 0.0
    %1531 = vmatprep.subr.mxu0 0.0
    %1532 = vmatpush2.msra.mxu0 0.0
    %1533 = vmatprep.subr.mxu0 0.0
    %1534 = vmatpush2.msra.mxu0 0.0
    %1535 = vmatprep.subr.mxu0 0.0
    %1536 = vmatpush2.msra.mxu0 0.0
    %1537 = vmatprep.subr.mxu0 0.0
    %1538 = vmatpush2.msra.mxu0 0.0
    %1539 = vmatprep.subr.mxu0 0.0
    %1540 = vmatpush2.msra.mxu0 0.0
    %1541 = vmatprep.subr.mxu0 0.0
    %1542 = vmatpush2.msra.mxu0 0.0
    %1543 = vmatprep.subr.mxu0 0.0
    %1544 = vmatpush2.msra.mxu0 0.0
    %1545 = vmatprep.subr.mxu0 0.0
    %1546 = vmatpush2.msra.mxu0 0.0
    %1547 = vmatprep.subr.mxu0 0.0
    %1548 = vmatpush2.msra.mxu0 0.0
    %1549 = vmatprep.subr.mxu0 0.0
    %1550 = vmatpush2.msra.mxu0 0.0
    %1551 = vmatprep.subr.mxu0 0.0
    %1552 = vmatpush2.msra.mxu0 0.0
    %1553 = vmatprep.mubr.f32.mxu0 0.0
    %v1554 = vand.u32 %v1283, 4294901760
    %1555 = vmatmul.mubr.f32.gmra.mxu0 %v1554
    %v1556 = vpop.f32.mrf.mxu0
    %v1557 = vadd.f32 %v1396, %v1556
    %v1558 = vpop.f32.mrf.mxu0
    %1559 = vmatprep.mubr.f32.mxu0 0.0
    %v1560 = vand.u32 %v1284, 4294901760
    %1561 = vmatmul.mubr.f32.gmra.mxu0 %v1560
    %v1562 = vpop.f32.mrf.mxu0
    %v1563 = vadd.f32 %v1406, %v1562
    %v1564 = vpop.f32.mrf.mxu0
    %1565 = vdwg.mxu0
    %1566 = vmatprep.subr.mxu0 0.0
    %v1567 = vand.u32 %v1300, 4294901760
    %v1568 = vsub.f32 %v1300, %v1567
    %1569 = vmatpush1.msra.mxu0 %v1568
    %1570 = vmatprep.subr.mxu0 0.0
    %v1571 = vand.u32 %v1299, 4294901760
    %v1572 = vsub.f32 %v1299, %v1571
    %1573 = vmatpush1.msra.mxu0 %v1572
    %1574 = vmatprep.subr.mxu0 0.0
    %v1575 = vand.u32 %v1298, 4294901760
    %v1576 = vsub.f32 %v1298, %v1575
    %1577 = vmatpush1.msra.mxu0 %v1576
    %1578 = vmatprep.subr.mxu0 0.0
    %v1579 = vand.u32 %v1297, 4294901760
    %v1580 = vsub.f32 %v1297, %v1579
    %1581 = vmatpush1.msra.mxu0 %v1580
    %1582 = vmatprep.subr.mxu0 0.0
    %v1583 = vand.u32 %v1296, 4294901760
    %v1584 = vsub.f32 %v1296, %v1583
    %1585 = vmatpush1.msra.mxu0 %v1584
    %1586 = vmatprep.subr.mxu0 0.0
    %v1587 = vand.u32 %v1295, 4294901760
    %v1588 = vsub.f32 %v1295, %v1587
    %1589 = vmatpush1.msra.mxu0 %v1588
    %1590 = vmatprep.subr.mxu0 0.0
    %v1591 = vand.u32 %v1294, 4294901760
    %v1592 = vsub.f32 %v1294, %v1591
    %1593 = vmatpush1.msra.mxu0 %v1592
    %1594 = vmatprep.subr.mxu0 0.0
    %v1595 = vand.u32 %v1293, 4294901760
    %v1596 = vsub.f32 %v1293, %v1595
    %1597 = vmatpush1.msra.mxu0 %v1596
    %1598 = vmatprep.subr.mxu0 0.0
    %v1599 = vand.u32 %v1292, 4294901760
    %v1600 = vsub.f32 %v1292, %v1599
    %1601 = vmatpush1.msra.mxu0 %v1600
    %1602 = vmatprep.subr.mxu0 0.0
    %v1603 = vand.u32 %v1291, 4294901760
    %v1604 = vsub.f32 %v1291, %v1603
    %1605 = vmatpush1.msra.mxu0 %v1604
    %1606 = vmatprep.subr.mxu0 0.0
    %v1607 = vand.u32 %v1290, 4294901760
    %v1608 = vsub.f32 %v1290, %v1607
    %1609 = vmatpush1.msra.mxu0 %v1608
    %1610 = vmatprep.subr.mxu0 0.0
    %v1611 = vand.u32 %v1289, 4294901760
    %v1612 = vsub.f32 %v1289, %v1611
    %1613 = vmatpush1.msra.mxu0 %v1612
    %1614 = vmatprep.subr.mxu0 0.0
    %v1615 = vand.u32 %v1288, 4294901760
    %v1616 = vsub.f32 %v1288, %v1615
    %1617 = vmatpush1.msra.mxu0 %v1616
    %1618 = vmatprep.subr.mxu0 0.0
    %v1619 = vand.u32 %v1287, 4294901760
    %v1620 = vsub.f32 %v1287, %v1619
    %1621 = vmatpush1.msra.mxu0 %v1620
    %1622 = vmatprep.subr.mxu0 0.0
    %v1623 = vand.u32 %v1286, 4294901760
    %v1624 = vsub.f32 %v1286, %v1623
    %1625 = vmatpush1.msra.mxu0 %v1624
    %1626 = vmatprep.subr.mxu0 0.0
    %v1627 = vand.u32 %v1285, 4294901760
    %v1628 = vsub.f32 %v1285, %v1627
    %1629 = vmatpush1.msra.mxu0 %v1628
    %1630 = vmatprep.subr.mxu0 0.0
    %1631 = vmatpush2.msra.mxu0 0.0
    %1632 = vmatprep.subr.mxu0 0.0
    %1633 = vmatpush2.msra.mxu0 0.0
    %1634 = vmatprep.subr.mxu0 0.0
    %1635 = vmatpush2.msra.mxu0 0.0
    %1636 = vmatprep.subr.mxu0 0.0
    %1637 = vmatpush2.msra.mxu0 0.0
    %1638 = vmatprep.subr.mxu0 0.0
    %1639 = vmatpush2.msra.mxu0 0.0
    %1640 = vmatprep.subr.mxu0 0.0
    %1641 = vmatpush2.msra.mxu0 0.0
    %1642 = vmatprep.subr.mxu0 0.0
    %1643 = vmatpush2.msra.mxu0 0.0
    %1644 = vmatprep.subr.mxu0 0.0
    %1645 = vmatpush2.msra.mxu0 0.0
    %1646 = vmatprep.subr.mxu0 0.0
    %1647 = vmatpush2.msra.mxu0 0.0
    %1648 = vmatprep.subr.mxu0 0.0
    %1649 = vmatpush2.msra.mxu0 0.0
    %1650 = vmatprep.subr.mxu0 0.0
    %1651 = vmatpush2.msra.mxu0 0.0
    %1652 = vmatprep.subr.mxu0 0.0
    %1653 = vmatpush2.msra.mxu0 0.0
    %1654 = vmatprep.subr.mxu0 0.0
    %1655 = vmatpush2.msra.mxu0 0.0
    %1656 = vmatprep.subr.mxu0 0.0
    %1657 = vmatpush2.msra.mxu0 0.0
    %1658 = vmatprep.subr.mxu0 0.0
    %1659 = vmatpush2.msra.mxu0 0.0
    %1660 = vmatprep.subr.mxu0 0.0
    %1661 = vmatpush2.msra.mxu0 0.0
    %1662 = vmatprep.mubr.f32.mxu0 0.0
    %v1663 = vand.u32 %v1283, 4294901760
    %v1664 = vsub.f32 %v1283, %v1663
    %1665 = vmatmul.mubr.f32.gmra.mxu0 %v1664
    %v1666 = vpop.f32.mrf.mxu0
    %v1667 = vadd.f32 %v1557, %v1666
    %v1668 = vpop.f32.mrf.mxu0
    %1669 = vmatprep.mubr.f32.mxu0 0.0
    %v1670 = vand.u32 %v1284, 4294901760
    %v1671 = vsub.f32 %v1284, %v1670
    %1672 = vmatmul.mubr.f32.gmra.mxu0 %v1671
    %v1673 = vpop.f32.mrf.mxu0
    %v1674 = vadd.f32 %v1563, %v1673
    %v1675 = vpop.f32.mrf.mxu0
    %1676 = vdwg.mxu0
    %1677 = vmatprep.subr.mxu0 0.0
    %v1678 = vand.u32 %v1300, 4294901760
    %1679 = vmatpush1.msra.mxu0 %v1678
    %1680 = vmatprep.subr.mxu0 0.0
    %v1681 = vand.u32 %v1299, 4294901760
    %1682 = vmatpush1.msra.mxu0 %v1681
    %1683 = vmatprep.subr.mxu0 0.0
    %v1684 = vand.u32 %v1298, 4294901760
    %1685 = vmatpush1.msra.mxu0 %v1684
    %1686 = vmatprep.subr.mxu0 0.0
    %v1687 = vand.u32 %v1297, 4294901760
    %1688 = vmatpush1.msra.mxu0 %v1687
    %1689 = vmatprep.subr.mxu0 0.0
    %v1690 = vand.u32 %v1296, 4294901760
    %1691 = vmatpush1.msra.mxu0 %v1690
    %1692 = vmatprep.subr.mxu0 0.0
    %v1693 = vand.u32 %v1295, 4294901760
    %1694 = vmatpush1.msra.mxu0 %v1693
    %1695 = vmatprep.subr.mxu0 0.0
    %v1696 = vand.u32 %v1294, 4294901760
    %1697 = vmatpush1.msra.mxu0 %v1696
    %1698 = vmatprep.subr.mxu0 0.0
    %v1699 = vand.u32 %v1293, 4294901760
    %1700 = vmatpush1.msra.mxu0 %v1699
    %1701 = vmatprep.subr.mxu0 0.0
    %v1702 = vand.u32 %v1292, 4294901760
    %1703 = vmatpush1.msra.mxu0 %v1702
    %1704 = vmatprep.subr.mxu0 0.0
    %v1705 = vand.u32 %v1291, 4294901760
    %1706 = vmatpush1.msra.mxu0 %v1705
    %1707 = vmatprep.subr.mxu0 0.0
    %v1708 = vand.u32 %v1290, 4294901760
    %1709 = vmatpush1.msra.mxu0 %v1708
    %1710 = vmatprep.subr.mxu0 0.0
    %v1711 = vand.u32 %v1289, 4294901760
    %1712 = vmatpush1.msra.mxu0 %v1711
    %1713 = vmatprep.subr.mxu0 0.0
    %v1714 = vand.u32 %v1288, 4294901760
    %1715 = vmatpush1.msra.mxu0 %v1714
    %1716 = vmatprep.subr.mxu0 0.0
    %v1717 = vand.u32 %v1287, 4294901760
    %1718 = vmatpush1.msra.mxu0 %v1717
    %1719 = vmatprep.subr.mxu0 0.0
    %v1720 = vand.u32 %v1286, 4294901760
    %1721 = vmatpush1.msra.mxu0 %v1720
    %1722 = vmatprep.subr.mxu0 0.0
    %v1723 = vand.u32 %v1285, 4294901760
    %1724 = vmatpush1.msra.mxu0 %v1723
    %1725 = vmatprep.subr.mxu0 0.0
    %1726 = vmatpush2.msra.mxu0 0.0
    %1727 = vmatprep.subr.mxu0 0.0
    %1728 = vmatpush2.msra.mxu0 0.0
    %1729 = vmatprep.subr.mxu0 0.0
    %1730 = vmatpush2.msra.mxu0 0.0
    %1731 = vmatprep.subr.mxu0 0.0
    %1732 = vmatpush2.msra.mxu0 0.0
    %1733 = vmatprep.subr.mxu0 0.0
    %1734 = vmatpush2.msra.mxu0 0.0
    %1735 = vmatprep.subr.mxu0 0.0
    %1736 = vmatpush2.msra.mxu0 0.0
    %1737 = vmatprep.subr.mxu0 0.0
    %1738 = vmatpush2.msra.mxu0 0.0
    %1739 = vmatprep.subr.mxu0 0.0
    %1740 = vmatpush2.msra.mxu0 0.0
    %1741 = vmatprep.subr.mxu0 0.0
    %1742 = vmatpush2.msra.mxu0 0.0
    %1743 = vmatprep.subr.mxu0 0.0
    %1744 = vmatpush2.msra.mxu0 0.0
    %1745 = vmatprep.subr.mxu0 0.0
    %1746 = vmatpush2.msra.mxu0 0.0
    %1747 = vmatprep.subr.mxu0 0.0
    %1748 = vmatpush2.msra.mxu0 0.0
    %1749 = vmatprep.subr.mxu0 0.0
    %1750 = vmatpush2.msra.mxu0 0.0
    %1751 = vmatprep.subr.mxu0 0.0
    %1752 = vmatpush2.msra.mxu0 0.0
    %1753 = vmatprep.subr.mxu0 0.0
    %1754 = vmatpush2.msra.mxu0 0.0
    %1755 = vmatprep.subr.mxu0 0.0
    %1756 = vmatpush2.msra.mxu0 0.0
    %1757 = vmatprep.mubr.f32.mxu0 0.0
    %v1758 = vand.u32 %v1283, 4294901760
    %v1759 = vsub.f32 %v1283, %v1758
    %v1760 = vand.u32 %v1759, 4294901760
    %1761 = vmatmul.mubr.f32.gmra.mxu0 %v1760
    %v1762 = vpop.f32.mrf.mxu0
    %v1763 = vadd.f32 %v1667, %v1762
    %v1764 = vpop.f32.mrf.mxu0
    %1765 = vmatprep.mubr.f32.mxu0 0.0
    %v1766 = vand.u32 %v1284, 4294901760
    %v1767 = vsub.f32 %v1284, %v1766
    %v1768 = vand.u32 %v1767, 4294901760
    %1769 = vmatmul.mubr.f32.gmra.mxu0 %v1768
    %v1770 = vpop.f32.mrf.mxu0
    %v1771 = vadd.f32 %v1674, %v1770
    %v1772 = vpop.f32.mrf.mxu0
    %1773 = vdwg.mxu0
    %1774 = vmatprep.subr.mxu0 0.0
    %v1775 = vand.u32 %v1300, 4294901760
    %v1776 = vsub.f32 %v1300, %v1775
    %v1777 = vand.u32 %v1776, 4294901760
    %1778 = vmatpush1.msra.mxu0 %v1777
    %1779 = vmatprep.subr.mxu0 0.0
    %v1780 = vand.u32 %v1299, 4294901760
    %v1781 = vsub.f32 %v1299, %v1780
    %v1782 = vand.u32 %v1781, 4294901760
    %1783 = vmatpush1.msra.mxu0 %v1782
    %1784 = vmatprep.subr.mxu0 0.0
    %v1785 = vand.u32 %v1298, 4294901760
    %v1786 = vsub.f32 %v1298, %v1785
    %v1787 = vand.u32 %v1786, 4294901760
    %1788 = vmatpush1.msra.mxu0 %v1787
    %1789 = vmatprep.subr.mxu0 0.0
    %v1790 = vand.u32 %v1297, 4294901760
    %v1791 = vsub.f32 %v1297, %v1790
    %v1792 = vand.u32 %v1791, 4294901760
    %1793 = vmatpush1.msra.mxu0 %v1792
    %1794 = vmatprep.subr.mxu0 0.0
    %v1795 = vand.u32 %v1296, 4294901760
    %v1796 = vsub.f32 %v1296, %v1795
    %v1797 = vand.u32 %v1796, 4294901760
    %1798 = vmatpush1.msra.mxu0 %v1797
    %1799 = vmatprep.subr.mxu0 0.0
    %v1800 = vand.u32 %v1295, 4294901760
    %v1801 = vsub.f32 %v1295, %v1800
    %v1802 = vand.u32 %v1801, 4294901760
    %1803 = vmatpush1.msra.mxu0 %v1802
    %1804 = vmatprep.subr.mxu0 0.0
    %v1805 = vand.u32 %v1294, 4294901760
    %v1806 = vsub.f32 %v1294, %v1805
    %v1807 = vand.u32 %v1806, 4294901760
    %1808 = vmatpush1.msra.mxu0 %v1807
    %1809 = vmatprep.subr.mxu0 0.0
    %v1810 = vand.u32 %v1293, 4294901760
    %v1811 = vsub.f32 %v1293, %v1810
    %v1812 = vand.u32 %v1811, 4294901760
    %1813 = vmatpush1.msra.mxu0 %v1812
    %1814 = vmatprep.subr.mxu0 0.0
    %v1815 = vand.u32 %v1292, 4294901760
    %v1816 = vsub.f32 %v1292, %v1815
    %v1817 = vand.u32 %v1816, 4294901760
    %1818 = vmatpush1.msra.mxu0 %v1817
    %1819 = vmatprep.subr.mxu0 0.0
    %v1820 = vand.u32 %v1291, 4294901760
    %v1821 = vsub.f32 %v1291, %v1820
    %v1822 = vand.u32 %v1821, 4294901760
    %1823 = vmatpush1.msra.mxu0 %v1822
    %1824 = vmatprep.subr.mxu0 0.0
    %v1825 = vand.u32 %v1290, 4294901760
    %v1826 = vsub.f32 %v1290, %v1825
    %v1827 = vand.u32 %v1826, 4294901760
    %1828 = vmatpush1.msra.mxu0 %v1827
    %1829 = vmatprep.subr.mxu0 0.0
    %v1830 = vand.u32 %v1289, 4294901760
    %v1831 = vsub.f32 %v1289, %v1830
    %v1832 = vand.u32 %v1831, 4294901760
    %1833 = vmatpush1.msra.mxu0 %v1832
    %1834 = vmatprep.subr.mxu0 0.0
    %v1835 = vand.u32 %v1288, 4294901760
    %v1836 = vsub.f32 %v1288, %v1835
    %v1837 = vand.u32 %v1836, 4294901760
    %1838 = vmatpush1.msra.mxu0 %v1837
    %1839 = vmatprep.subr.mxu0 0.0
    %v1840 = vand.u32 %v1287, 4294901760
    %v1841 = vsub.f32 %v1287, %v1840
    %v1842 = vand.u32 %v1841, 4294901760
    %1843 = vmatpush1.msra.mxu0 %v1842
    %1844 = vmatprep.subr.mxu0 0.0
    %v1845 = vand.u32 %v1286, 4294901760
    %v1846 = vsub.f32 %v1286, %v1845
    %v1847 = vand.u32 %v1846, 4294901760
    %1848 = vmatpush1.msra.mxu0 %v1847
    %1849 = vmatprep.subr.mxu0 0.0
    %v1850 = vand.u32 %v1285, 4294901760
    %v1851 = vsub.f32 %v1285, %v1850
    %v1852 = vand.u32 %v1851, 4294901760
    %1853 = vmatpush1.msra.mxu0 %v1852
    %1854 = vmatprep.subr.mxu0 0.0
    %1855 = vmatpush2.msra.mxu0 0.0
    %1856 = vmatprep.subr.mxu0 0.0
    %1857 = vmatpush2.msra.mxu0 0.0
    %1858 = vmatprep.subr.mxu0 0.0
    %1859 = vmatpush2.msra.mxu0 0.0
    %1860 = vmatprep.subr.mxu0 0.0
    %1861 = vmatpush2.msra.mxu0 0.0
    %1862 = vmatprep.subr.mxu0 0.0
    %1863 = vmatpush2.msra.mxu0 0.0
    %1864 = vmatprep.subr.mxu0 0.0
    %1865 = vmatpush2.msra.mxu0 0.0
    %1866 = vmatprep.subr.mxu0 0.0
    %1867 = vmatpush2.msra.mxu0 0.0
    %1868 = vmatprep.subr.mxu0 0.0
    %1869 = vmatpush2.msra.mxu0 0.0
    %1870 = vmatprep.subr.mxu0 0.0
    %1871 = vmatpush2.msra.mxu0 0.0
    %1872 = vmatprep.subr.mxu0 0.0
    %1873 = vmatpush2.msra.mxu0 0.0
    %1874 = vmatprep.subr.mxu0 0.0
    %1875 = vmatpush2.msra.mxu0 0.0
    %1876 = vmatprep.subr.mxu0 0.0
    %1877 = vmatpush2.msra.mxu0 0.0
    %1878 = vmatprep.subr.mxu0 0.0
    %1879 = vmatpush2.msra.mxu0 0.0
    %1880 = vmatprep.subr.mxu0 0.0
    %1881 = vmatpush2.msra.mxu0 0.0
    %1882 = vmatprep.subr.mxu0 0.0
    %1883 = vmatpush2.msra.mxu0 0.0
    %1884 = vmatprep.subr.mxu0 0.0
    %1885 = vmatpush2.msra.mxu0 0.0
    %1886 = vmatprep.mubr.f32.mxu0 0.0
    %v1887 = vand.u32 %v1283, 4294901760
    %1888 = vmatmul.mubr.f32.gmra.mxu0 %v1887
    %v1889 = vpop.f32.mrf.mxu0
    %v1890 = vadd.f32 %v1763, %v1889
    %v1891 = vpop.f32.mrf.mxu0
    %1892 = vmatprep.mubr.f32.mxu0 0.0
    %v1893 = vand.u32 %v1284, 4294901760
    %1894 = vmatmul.mubr.f32.gmra.mxu0 %v1893
    %v1895 = vpop.f32.mrf.mxu0
    %v1896 = vadd.f32 %v1771, %v1895
    %v1897 = vpop.f32.mrf.mxu0
    %1898 = vdwg.mxu0
    %1899 = vmatprep.subr.mxu0 0.0
    %v1900 = vand.u32 %v1300, 4294901760
    %1901 = vmatpush1.msra.mxu0 %v1900
    %1902 = vmatprep.subr.mxu0 0.0
    %v1903 = vand.u32 %v1299, 4294901760
    %1904 = vmatpush1.msra.mxu0 %v1903
    %1905 = vmatprep.subr.mxu0 0.0
    %v1906 = vand.u32 %v1298, 4294901760
    %1907 = vmatpush1.msra.mxu0 %v1906
    %1908 = vmatprep.subr.mxu0 0.0
    %v1909 = vand.u32 %v1297, 4294901760
    %1910 = vmatpush1.msra.mxu0 %v1909
    %1911 = vmatprep.subr.mxu0 0.0
    %v1912 = vand.u32 %v1296, 4294901760
    %1913 = vmatpush1.msra.mxu0 %v1912
    %1914 = vmatprep.subr.mxu0 0.0
    %v1915 = vand.u32 %v1295, 4294901760
    %1916 = vmatpush1.msra.mxu0 %v1915
    %1917 = vmatprep.subr.mxu0 0.0
    %v1918 = vand.u32 %v1294, 4294901760
    %1919 = vmatpush1.msra.mxu0 %v1918
    %1920 = vmatprep.subr.mxu0 0.0
    %v1921 = vand.u32 %v1293, 4294901760
    %1922 = vmatpush1.msra.mxu0 %v1921
    %1923 = vmatprep.subr.mxu0 0.0
    %v1924 = vand.u32 %v1292, 4294901760
    %1925 = vmatpush1.msra.mxu0 %v1924
    %1926 = vmatprep.subr.mxu0 0.0
    %v1927 = vand.u32 %v1291, 4294901760
    %1928 = vmatpush1.msra.mxu0 %v1927
    %1929 = vmatprep.subr.mxu0 0.0
    %v1930 = vand.u32 %v1290, 4294901760
    %1931 = vmatpush1.msra.mxu0 %v1930
    %1932 = vmatprep.subr.mxu0 0.0
    %v1933 = vand.u32 %v1289, 4294901760
    %1934 = vmatpush1.msra.mxu0 %v1933
    %1935 = vmatprep.subr.mxu0 0.0
    %v1936 = vand.u32 %v1288, 4294901760
    %1937 = vmatpush1.msra.mxu0 %v1936
    %1938 = vmatprep.subr.mxu0 0.0
    %v1939 = vand.u32 %v1287, 4294901760
    %1940 = vmatpush1.msra.mxu0 %v1939
    %1941 = vmatprep.subr.mxu0 0.0
    %v1942 = vand.u32 %v1286, 4294901760
    %1943 = vmatpush1.msra.mxu0 %v1942
    %1944 = vmatprep.subr.mxu0 0.0
    %v1945 = vand.u32 %v1285, 4294901760
    %1946 = vmatpush1.msra.mxu0 %v1945
    %1947 = vmatprep.subr.mxu0 0.0
    %1948 = vmatpush2.msra.mxu0 0.0
    %1949 = vmatprep.subr.mxu0 0.0
    %1950 = vmatpush2.msra.mxu0 0.0
    %1951 = vmatprep.subr.mxu0 0.0
    %1952 = vmatpush2.msra.mxu0 0.0
    %1953 = vmatprep.subr.mxu0 0.0
    %1954 = vmatpush2.msra.mxu0 0.0
    %1955 = vmatprep.subr.mxu0 0.0
    %1956 = vmatpush2.msra.mxu0 0.0
    %1957 = vmatprep.subr.mxu0 0.0
    %1958 = vmatpush2.msra.mxu0 0.0
    %1959 = vmatprep.subr.mxu0 0.0
    %1960 = vmatpush2.msra.mxu0 0.0
    %1961 = vmatprep.subr.mxu0 0.0
    %1962 = vmatpush2.msra.mxu0 0.0
    %1963 = vmatprep.subr.mxu0 0.0
    %1964 = vmatpush2.msra.mxu0 0.0
    %1965 = vmatprep.subr.mxu0 0.0
    %1966 = vmatpush2.msra.mxu0 0.0
    %1967 = vmatprep.subr.mxu0 0.0
    %1968 = vmatpush2.msra.mxu0 0.0
    %1969 = vmatprep.subr.mxu0 0.0
    %1970 = vmatpush2.msra.mxu0 0.0
    %1971 = vmatprep.subr.mxu0 0.0
    %1972 = vmatpush2.msra.mxu0 0.0
    %1973 = vmatprep.subr.mxu0 0.0
    %1974 = vmatpush2.msra.mxu0 0.0
    %1975 = vmatprep.subr.mxu0 0.0
    %1976 = vmatpush2.msra.mxu0 0.0
    %1977 = vmatprep.subr.mxu0 0.0
    %1978 = vmatpush2.msra.mxu0 0.0
    %1979 = vmatprep.mubr.f32.mxu0 0.0
    %v1980 = vand.u32 %v1283, 4294901760
    %1981 = vmatmul.mubr.f32.gmra.mxu0 %v1980
    %v1982 = vpop.f32.mrf.mxu0
    %v1983 = vadd.f32 %v1890, %v1982
    %v1984 = vpop.f32.mrf.mxu0
    %1985 = vmatprep.mubr.f32.mxu0 0.0
    %v1986 = vand.u32 %v1284, 4294901760
    %1987 = vmatmul.mubr.f32.gmra.mxu0 %v1986
    %v1988 = vpop.f32.mrf.mxu0
    %v1989 = vadd.f32 %v1896, %v1988
    %v1990 = vpop.f32.mrf.mxu0
    %1991 = vdwg.mxu0
    %v1992 = vtanh.pop %v1983
    %v1993 = vtanh.pop %v1989
    %1994 = vst [vmem:[%s7] sm:$0xff] %v1992
    %1995 = vst [vmem:[%s7 + $0x8] sm:$0xff] %v1993
    // Predicated region
    $region38: #{actor_forward.1} parent=1 // pred_check
      _
    $region39: #{actor_forward.1} parent=1 // pred_check_branch
      %1997 = sbr.rel (0) target = $region41
    $region40: #{actor_forward.1} parent=1 // pred_region
      _
    $region41: #{actor_forward.1} parent=1 // pred_fallthru
      _
    // Predicated region
    $region42: #{actor_forward.1} parent=1 // pred_check
      _
    $region43: #{actor_forward.1} parent=1 // pred_check_branch
      %1999 = sbr.rel (0) target = $region45
    $region44: #{actor_forward.1} parent=1 // pred_region
      _
    $region45: #{actor_forward.1} parent=1 // pred_fallthru
      _
    %2000 = vsyncpa [#allocation3], 1
    %2001 = vsyncpa [#allocation5], 1

</llo_original>
